<compile_context>
chip_gen: v6e
topology: v6e:2x2x1
jax: 0.10.0
libtpu: 0.0.40
codegen_flags: <defaults>
</compile_context>

<pallas_src>
import math

import jax
import jax.numpy as jnp
from jax.experimental import pallas as pl
from jax.experimental.pallas import tpu as pltpu


def _round_up(x, m):
    return ((x + m - 1) // m) * m


def _critic_kernel(x_ref, a_ref,
                   w1_ref, b1_ref,
                   w2a_ref, w2b_ref, b2_ref,
                   w3_ref, b3_ref,
                   w4_ref, b4_ref,
                   q_ref):
    # --- Layer 1: sum_own_fc — (Bt, D_own) @ (D_own, 1024), bf16 in / f32 acc ---
    h1 = jnp.dot(x_ref[...], w1_ref[...], preferred_element_type=jnp.float32)
    h1 = jnp.maximum(h1 + b1_ref[...], 0.0)                       # f32 epilogue

    # --- Layer 2: combine_all[0] — concat done as a split matmul -----------------
    # Big 1024-K half on the MXU.
    h2 = jnp.dot(h1.astype(jnp.bfloat16), w2a_ref[...],
                 preferred_element_type=jnp.float32)
    h2 = h2 + b2_ref[...]
    # Tiny-K actor half (K = n_agents*n_actions) on the VPU: unrolled broadcast FMAs.
    a32 = a_ref[...].astype(jnp.float32)                          # (Bt, A)
    w2b = w2b_ref[...].astype(jnp.float32)                        # (A, 512)
    for k in range(w2b.shape[0]):                                 # static, small
        h2 = h2 + a32[:, k:k + 1] * w2b[k:k + 1, :]
    h2 = jnp.maximum(h2, 0.0)

    # --- Layer 3: combine_all[2] — (Bt, 512) @ (512, 256) ------------------------
    h3 = jnp.dot(h2.astype(jnp.bfloat16), w3_ref[...],
                 preferred_element_type=jnp.float32)
    h3 = jnp.maximum(h3 + b3_ref[...], 0.0)

    # --- Layer 4: combine_all[4] — N=1, so VPU multiply + XLU lane reduce --------
    w4 = w4_ref[...].astype(jnp.float32)                          # (1, 256)
    q = jnp.sum(h3 * w4, axis=-1, keepdims=True) + b4_ref[0]      # (Bt, 1)

    # Lane-dense store (unmasked vst); wrapper slices column 0.
    q_ref[...] = jnp.broadcast_to(q, q_ref.shape)


def init_params(key, d_own, n_agents, n_actions, w_dtype=jnp.bfloat16):
    """Synthetic init mimicking torch.nn.Linear's U(-1/sqrt(fan_in), 1/sqrt(fan_in)).
    Weights stored (in, out) in bf16; biases kept in f32."""
    a_dim = n_agents * n_actions

    def linear(key, fan_in, fan_out):
        kw, kb = jax.random.split(key)
        bound = 1.0 / math.sqrt(fan_in)
        w = jax.random.uniform(kw, (fan_in, fan_out), jnp.float32, -bound, bound)
        b = jax.random.uniform(kb, (1, fan_out), jnp.float32, -bound, bound)
        return w, b

    k1, k2, k3, k4 = jax.random.split(key, 4)
    w1, b1 = linear(k1, d_own, 1024)
    w2, b2 = linear(k2, 1024 + a_dim, 512)
    w3, b3 = linear(k3, 512, 256)
    w4, b4 = linear(k4, 256, 1)
    w2a, w2b = w2[:1024], w2[1024:]       # split rows for the concat-as-split-matmul
    w4row = w4.T                           # (1, 256) row for the VPU output layer
    b4s = b4.reshape(1)                    # (1,) scalar bias (lives in SMEM)
    return (w1.astype(w_dtype), b1,
            w2a.astype(w_dtype), w2b.astype(w_dtype), b2,
            w3.astype(w_dtype), b3,
            w4row.astype(w_dtype), b4s)


def critic_forward(state, actor_obs, params, *, block_b=512):
    """state: (B, 1, d_own)  actor_obs: (B, n_agents*n_actions)  ->  (B, 1) f32."""
    w1, b1, w2a, w2b, b2, w3, b3, w4row, b4 = params
    B = state.shape[0]
    x = state.reshape(B, -1)               # .squeeze(1) equivalent
    a = actor_obs
    d_own = x.shape[1]
    a_dim = a.shape[1]

    # Batch tile: multiple of 8 (sublane), up to block_b (MXU-friendly multiple of 256).
    Bt = min(block_b, _round_up(B, 8))
    B_pad = _round_up(B, Bt)
    if B_pad != B:
        x = jnp.pad(x, ((0, B_pad - B), (0, 0)))
        a = jnp.pad(a, ((0, B_pad - B), (0, 0)))
    x = x.astype(jnp.bfloat16)
    a = a.astype(jnp.bfloat16)

    grid = (B_pad // Bt,)

    batch_spec = lambda d: pl.BlockSpec((Bt, d), lambda i: (i, 0))
    const_spec = lambda r, c: pl.BlockSpec((r, c), lambda i: (0, 0))  # VMEM-resident weights

    flops = 2 * B_pad * (d_own * 1024 + 1024 * 512 + a_dim * 512 + 512 * 256 + 256)
    w_bytes = sum(int(p.size) * p.dtype.itemsize
                  for p in (w1, b1, w2a, w2b, b2, w3, b3, w4row, b4))
    bytes_accessed = int(x.size) * 2 + int(a.size) * 2 + w_bytes + B_pad * 128 * 4

    out = pl.pallas_call(
        _critic_kernel,
        out_shape=jax.ShapeDtypeStruct((B_pad, 128), jnp.float32),
        grid=grid,
        in_specs=[
            batch_spec(d_own),                      # state tile
            batch_spec(a_dim),                      # actor tile
            const_spec(d_own, 1024),                # w1
            const_spec(1, 1024),                    # b1
            const_spec(1024, 512),                  # w2a
            const_spec(a_dim, 512),                 # w2b
            const_spec(1, 512),                     # b2
            const_spec(512, 256),                   # w3
            const_spec(1, 256),                     # b3
            const_spec(1, 256),                     # w4 (row)
            pl.BlockSpec(memory_space=pltpu.MemorySpace.SMEM),   # b4 scalar
        ],
        out_specs=pl.BlockSpec((Bt, 128), lambda i: (i, 0)),
        compiler_params=pltpu.CompilerParams(
            dimension_semantics=("parallel",)),
        cost_estimate=pl.CostEstimate(flops=flops, transcendentals=0,
                                      bytes_accessed=bytes_accessed),
    )(x, a, w1, b1, w2a, w2b, b2, w3, b3, w4row, b4)

    return out[:B, :1]


def _reference_matched(state, actor_obs, params):
    """Mirrors the kernel's bf16-matmul / f32-accumulation math."""
    w1, b1, w2a, w2b, b2, w3, b3, w4row, b4 = params
    x = state.reshape(state.shape[0], -1).astype(jnp.bfloat16)
    a = actor_obs.astype(jnp.bfloat16)
    h1 = jax.nn.relu(jnp.dot(x, w1, preferred_element_type=jnp.float32) + b1)
    h2 = (jnp.dot(h1.astype(jnp.bfloat16), w2a, preferred_element_type=jnp.float32)
          + jnp.dot(a.astype(jnp.float32), w2b.astype(jnp.float32),
                    preferred_element_type=jnp.float32)
          + b2)
    h2 = jax.nn.relu(h2)
    h3 = jax.nn.relu(jnp.dot(h2.astype(jnp.bfloat16), w3,
                             preferred_element_type=jnp.float32) + b3)
    return jnp.sum(h3 * w4row.astype(jnp.float32), axis=-1, keepdims=True) + b4


def _reference_f32(state, actor_obs, params):
    """Torch-like full-f32 forward (loose-tolerance sanity check of semantics)."""
    w1, b1, w2a, w2b, b2, w3, b3, w4row, b4 = params
    w1, w2a, w2b, w3, w4row = (w.astype(jnp.float32) for w in (w1, w2a, w2b, w3, w4row))
    x = state.reshape(state.shape[0], -1)
    h1 = jax.nn.relu(x @ w1 + b1)
    cat = jnp.concatenate([h1, actor_obs], axis=1)
    w2 = jnp.concatenate([w2a, w2b], axis=0)
    h2 = jax.nn.relu(cat @ w2 + b2)
    h3 = jax.nn.relu(h2 @ w3 + b3)
    return h3 @ w4row.T + b4


if __name__ == "__main__":
    # Small, forward-consistent shapes (also exercises the batch-padding path).
    batch = 10
    critic_obs = [6, 4, 5]            # only critic_obs[0] is used by forward
    n_agents = 3
    n_actions = 2
    d_own = critic_obs[0] * n_agents          # 18
    a_dim = n_agents * n_actions              # 6

    key = jax.random.PRNGKey(0)
    k_state, k_actor, k_params = jax.random.split(key, 3)

    state = jax.random.normal(k_state, (batch, 1, d_own), jnp.float32)
    actor_obs = jax.random.normal(k_actor, (batch, a_dim), jnp.float32)
    params = init_params(k_params, d_own, n_agents, n_actions)

    q = jax.block_until_ready(critic_forward(state, actor_obs, params))

    q_match = _reference_matched(state, actor_obs, params)   # same precision path
    q_f32 = _reference_f32(state, actor_obs, params)         # PyTorch-style f32

    assert q.shape == (batch, 1)
    assert jnp.allclose(q, q_match, atol=2e-3, rtol=2e-3), \
        f"mismatch vs bf16-matched reference: {jnp.max(jnp.abs(q - q_match))}"
    assert jnp.allclose(q, q_f32, atol=5e-2, rtol=5e-2), \
        f"mismatch vs f32 reference: {jnp.max(jnp.abs(q - q_f32))}"
    print("KERNEL_OK")
</pallas_src>

<mosaic_0001>
module attributes {stable_mosaic.version = 11 : i64} {
  func.func @_critic_kernel(%arg0: i32, %arg1: memref<16x18xbf16, #tpu.memory_space<vmem>>, %arg2: memref<16x6xbf16, #tpu.memory_space<vmem>>, %arg3: memref<18x1024xbf16, #tpu.memory_space<vmem>>, %arg4: memref<1x1024xf32, #tpu.memory_space<vmem>>, %arg5: memref<1024x512xbf16, #tpu.memory_space<vmem>>, %arg6: memref<6x512xbf16, #tpu.memory_space<vmem>>, %arg7: memref<1x512xf32, #tpu.memory_space<vmem>>, %arg8: memref<512x256xbf16, #tpu.memory_space<vmem>>, %arg9: memref<1x256xf32, #tpu.memory_space<vmem>>, %arg10: memref<1x256xbf16, #tpu.memory_space<vmem>>, %arg11: memref<1xf32, #tpu.memory_space<smem>>, %arg12: memref<16x128xf32, #tpu.memory_space<vmem>>) attributes {dimension_semantics = [#tpu.dimension_semantics<parallel>], iteration_bounds = array<i64: 1>, scalar_prefetch = 0 : i64, scratch_operands = 0 : i64, tpu.core_type = #tpu.core_type<tc>, window_params = [{transform_indices = @transform_0, window_bounds = array<i64: 16, 18>}, {transform_indices = @transform_1, window_bounds = array<i64: 16, 6>}, {pipeline_mode = #tpu.pipeline_mode<synchronous>, transform_indices = @transform_2, window_bounds = array<i64: 18, 1024>}, {pipeline_mode = #tpu.pipeline_mode<synchronous>, transform_indices = @transform_3, window_bounds = array<i64: 1, 1024>}, {pipeline_mode = #tpu.pipeline_mode<synchronous>, transform_indices = @transform_4, window_bounds = array<i64: 1024, 512>}, {pipeline_mode = #tpu.pipeline_mode<synchronous>, transform_indices = @transform_5, window_bounds = array<i64: 6, 512>}, {pipeline_mode = #tpu.pipeline_mode<synchronous>, transform_indices = @transform_6, window_bounds = array<i64: 1, 512>}, {pipeline_mode = #tpu.pipeline_mode<synchronous>, transform_indices = @transform_7, window_bounds = array<i64: 512, 256>}, {pipeline_mode = #tpu.pipeline_mode<synchronous>, transform_indices = @transform_8, window_bounds = array<i64: 1, 256>}, {pipeline_mode = #tpu.pipeline_mode<synchronous>, transform_indices = @transform_9, window_bounds = array<i64: 1, 256>}, {transform_indices = @transform_10, window_bounds = array<i64: 1>}, {transform_indices = @transform_11, window_bounds = array<i64: 16, 128>}]} {
    %c0 = arith.constant 0 : index
    %c0_0 = arith.constant 0 : index
    %0 = vector.load %arg1[%c0, %c0_0] : memref<16x18xbf16, #tpu.memory_space<vmem>>, vector<16x18xbf16>
    %c0_1 = arith.constant 0 : index
    %c0_2 = arith.constant 0 : index
    %1 = vector.load %arg3[%c0_1, %c0_2] : memref<18x1024xbf16, #tpu.memory_space<vmem>>, vector<18x1024xbf16>
    %cst = arith.constant dense<0.000000e+00> : vector<16x1024xf32>
    %2 = tpu.matmul %0, %1, %cst {dimension_numbers = #tpu.dot_dimension_numbers<[1], [0], [0], [1], [0, 0, 1, 1], [], []>} : vector<16x18xbf16>, vector<18x1024xbf16>, vector<16x1024xf32> -> vector<16x1024xf32>
    %c0_3 = arith.constant 0 : index
    %c0_4 = arith.constant 0 : index
    %3 = vector.load %arg4[%c0_3, %c0_4] : memref<1x1024xf32, #tpu.memory_space<vmem>>, vector<1x1024xf32>
    %4 = vector.broadcast %3 : vector<1x1024xf32> to vector<16x1024xf32>
    %5 = arith.addf %2, %4 : vector<16x1024xf32>
    %cst_5 = arith.constant 0.000000e+00 : f32
    %6 = vector.broadcast %cst_5 : f32 to vector<16x1024xf32>
    %7 = arith.maximumf %5, %6 : vector<16x1024xf32>
    %8 = arith.truncf %7 : vector<16x1024xf32> to vector<16x1024xbf16>
    %c0_6 = arith.constant 0 : index
    %c0_7 = arith.constant 0 : index
    %9 = vector.load %arg5[%c0_6, %c0_7] : memref<1024x512xbf16, #tpu.memory_space<vmem>>, vector<1024x512xbf16>
    %cst_8 = arith.constant dense<0.000000e+00> : vector<16x512xf32>
    %10 = tpu.matmul %8, %9, %cst_8 {dimension_numbers = #tpu.dot_dimension_numbers<[1], [0], [0], [1], [0, 0, 1, 1], [], []>} : vector<16x1024xbf16>, vector<1024x512xbf16>, vector<16x512xf32> -> vector<16x512xf32>
    %c0_9 = arith.constant 0 : index
    %c0_10 = arith.constant 0 : index
    %11 = vector.load %arg7[%c0_9, %c0_10] : memref<1x512xf32, #tpu.memory_space<vmem>>, vector<1x512xf32>
    %12 = vector.broadcast %11 : vector<1x512xf32> to vector<16x512xf32>
    %13 = arith.addf %10, %12 : vector<16x512xf32>
    %c0_11 = arith.constant 0 : index
    %c0_12 = arith.constant 0 : index
    %14 = vector.load %arg2[%c0_11, %c0_12] : memref<16x6xbf16, #tpu.memory_space<vmem>>, vector<16x6xbf16>
    %15 = arith.extf %14 : vector<16x6xbf16> to vector<16x6xf32>
    %c0_13 = arith.constant 0 : index
    %c0_14 = arith.constant 0 : index
    %16 = vector.load %arg6[%c0_13, %c0_14] : memref<6x512xbf16, #tpu.memory_space<vmem>>, vector<6x512xbf16>
    %17 = arith.extf %16 : vector<6x512xbf16> to vector<6x512xf32>
    %18 = vector.extract_strided_slice %15 {offsets = [0, 0], sizes = [16, 1], strides = [1, 1]} : vector<16x6xf32> to vector<16x1xf32>
    %19 = vector.extract_strided_slice %17 {offsets = [0, 0], sizes = [1, 512], strides = [1, 1]} : vector<6x512xf32> to vector<1x512xf32>
    %20 = vector.broadcast %18 : vector<16x1xf32> to vector<16x512xf32>
    %21 = vector.broadcast %19 : vector<1x512xf32> to vector<16x512xf32>
    %22 = arith.mulf %20, %21 : vector<16x512xf32>
    %23 = arith.addf %13, %22 : vector<16x512xf32>
    %24 = vector.extract_strided_slice %15 {offsets = [0, 1], sizes = [16, 1], strides = [1, 1]} : vector<16x6xf32> to vector<16x1xf32>
    %25 = vector.extract_strided_slice %17 {offsets = [1, 0], sizes = [1, 512], strides = [1, 1]} : vector<6x512xf32> to vector<1x512xf32>
    %26 = vector.broadcast %24 : vector<16x1xf32> to vector<16x512xf32>
    %27 = vector.broadcast %25 : vector<1x512xf32> to vector<16x512xf32>
    %28 = arith.mulf %26, %27 : vector<16x512xf32>
    %29 = arith.addf %23, %28 : vector<16x512xf32>
    %30 = vector.extract_strided_slice %15 {offsets = [0, 2], sizes = [16, 1], strides = [1, 1]} : vector<16x6xf32> to vector<16x1xf32>
    %31 = vector.extract_strided_slice %17 {offsets = [2, 0], sizes = [1, 512], strides = [1, 1]} : vector<6x512xf32> to vector<1x512xf32>
    %32 = vector.broadcast %30 : vector<16x1xf32> to vector<16x512xf32>
    %33 = vector.broadcast %31 : vector<1x512xf32> to vector<16x512xf32>
    %34 = arith.mulf %32, %33 : vector<16x512xf32>
    %35 = arith.addf %29, %34 : vector<16x512xf32>
    %36 = vector.extract_strided_slice %15 {offsets = [0, 3], sizes = [16, 1], strides = [1, 1]} : vector<16x6xf32> to vector<16x1xf32>
    %37 = vector.extract_strided_slice %17 {offsets = [3, 0], sizes = [1, 512], strides = [1, 1]} : vector<6x512xf32> to vector<1x512xf32>
    %38 = vector.broadcast %36 : vector<16x1xf32> to vector<16x512xf32>
    %39 = vector.broadcast %37 : vector<1x512xf32> to vector<16x512xf32>
    %40 = arith.mulf %38, %39 : vector<16x512xf32>
    %41 = arith.addf %35, %40 : vector<16x512xf32>
    %42 = vector.extract_strided_slice %15 {offsets = [0, 4], sizes = [16, 1], strides = [1, 1]} : vector<16x6xf32> to vector<16x1xf32>
    %43 = vector.extract_strided_slice %17 {offsets = [4, 0], sizes = [1, 512], strides = [1, 1]} : vector<6x512xf32> to vector<1x512xf32>
    %44 = vector.broadcast %42 : vector<16x1xf32> to vector<16x512xf32>
    %45 = vector.broadcast %43 : vector<1x512xf32> to vector<16x512xf32>
    %46 = arith.mulf %44, %45 : vector<16x512xf32>
    %47 = arith.addf %41, %46 : vector<16x512xf32>
    %48 = vector.extract_strided_slice %15 {offsets = [0, 5], sizes = [16, 1], strides = [1, 1]} : vector<16x6xf32> to vector<16x1xf32>
    %49 = vector.extract_strided_slice %17 {offsets = [5, 0], sizes = [1, 512], strides = [1, 1]} : vector<6x512xf32> to vector<1x512xf32>
    %50 = vector.broadcast %48 : vector<16x1xf32> to vector<16x512xf32>
    %51 = vector.broadcast %49 : vector<1x512xf32> to vector<16x512xf32>
    %52 = arith.mulf %50, %51 : vector<16x512xf32>
    %53 = arith.addf %47, %52 : vector<16x512xf32>
    %cst_15 = arith.constant 0.000000e+00 : f32
    %54 = vector.broadcast %cst_15 : f32 to vector<16x512xf32>
    %55 = arith.maximumf %53, %54 : vector<16x512xf32>
    %56 = arith.truncf %55 : vector<16x512xf32> to vector<16x512xbf16>
    %c0_16 = arith.constant 0 : index
    %c0_17 = arith.constant 0 : index
    %57 = vector.load %arg8[%c0_16, %c0_17] : memref<512x256xbf16, #tpu.memory_space<vmem>>, vector<512x256xbf16>
    %cst_18 = arith.constant dense<0.000000e+00> : vector<16x256xf32>
    %58 = tpu.matmul %56, %57, %cst_18 {dimension_numbers = #tpu.dot_dimension_numbers<[1], [0], [0], [1], [0, 0, 1, 1], [], []>} : vector<16x512xbf16>, vector<512x256xbf16>, vector<16x256xf32> -> vector<16x256xf32>
    %c0_19 = arith.constant 0 : index
    %c0_20 = arith.constant 0 : index
    %59 = vector.load %arg9[%c0_19, %c0_20] : memref<1x256xf32, #tpu.memory_space<vmem>>, vector<1x256xf32>
    %60 = vector.broadcast %59 : vector<1x256xf32> to vector<16x256xf32>
    %61 = arith.addf %58, %60 : vector<16x256xf32>
    %cst_21 = arith.constant 0.000000e+00 : f32
    %62 = vector.broadcast %cst_21 : f32 to vector<16x256xf32>
    %63 = arith.maximumf %61, %62 : vector<16x256xf32>
    %c0_22 = arith.constant 0 : index
    %c0_23 = arith.constant 0 : index
    %64 = vector.load %arg10[%c0_22, %c0_23] : memref<1x256xbf16, #tpu.memory_space<vmem>>, vector<1x256xbf16>
    %65 = arith.extf %64 : vector<1x256xbf16> to vector<1x256xf32>
    %66 = vector.broadcast %65 : vector<1x256xf32> to vector<16x256xf32>
    %67 = arith.mulf %63, %66 : vector<16x256xf32>
    %cst_24 = arith.constant dense<0.000000e+00> : vector<16xf32>
    %68 = vector.multi_reduction <add>, %67, %cst_24 [1] : vector<16x256xf32> to vector<16xf32>
    %69 = vector.shape_cast %68 : vector<16xf32> to vector<16x1xf32>
    %c0_25 = arith.constant 0 : index
    %70 = memref.load %arg11[%c0_25] : memref<1xf32, #tpu.memory_space<smem>>
    %71 = vector.broadcast %70 : f32 to vector<16x1xf32>
    %72 = arith.addf %69, %71 : vector<16x1xf32>
    %73 = vector.shape_cast %72 : vector<16x1xf32> to vector<16x1xf32>
    %74 = vector.broadcast %73 : vector<16x1xf32> to vector<16x128xf32>
    %c0_26 = arith.constant 0 : index
    %c0_27 = arith.constant 0 : index
    %75 = vector.load %arg12[%c0_26, %c0_27] : memref<16x128xf32, #tpu.memory_space<vmem>>, vector<16x128xf32>
    tpu.vector_store %arg12[%c0_26, %c0_27], %74 {strides = array<i32>} : memref<16x128xf32, #tpu.memory_space<vmem>>, vector<16x128xf32>,
    return
  }
  func.func @transform_0(%arg0: i32) -> (i32, i32) {
    %c0_i32 = arith.constant 0 : i32
    %c0_i32_0 = arith.constant 0 : i32
    return %arg0, %c0_i32 : i32, i32
  }
  func.func @transform_1(%arg0: i32) -> (i32, i32) {
    %c0_i32 = arith.constant 0 : i32
    %c0_i32_0 = arith.constant 0 : i32
    return %arg0, %c0_i32 : i32, i32
  }
  func.func @transform_2(%arg0: i32) -> (i32, i32) {
    %c0_i32 = arith.constant 0 : i32
    %c0_i32_0 = arith.constant 0 : i32
    %c0_i32_1 = arith.constant 0 : i32
    return %c0_i32, %c0_i32_0 : i32, i32
  }
  func.func @transform_3(%arg0: i32) -> (i32, i32) {
    %c0_i32 = arith.constant 0 : i32
    %c0_i32_0 = arith.constant 0 : i32
    %c0_i32_1 = arith.constant 0 : i32
    return %c0_i32, %c0_i32_0 : i32, i32
  }
  func.func @transform_4(%arg0: i32) -> (i32, i32) {
    %c0_i32 = arith.constant 0 : i32
    %c0_i32_0 = arith.constant 0 : i32
    %c0_i32_1 = arith.constant 0 : i32
    return %c0_i32, %c0_i32_0 : i32, i32
  }
  func.func @transform_5(%arg0: i32) -> (i32, i32) {
    %c0_i32 = arith.constant 0 : i32
    %c0_i32_0 = arith.constant 0 : i32
    %c0_i32_1 = arith.constant 0 : i32
    return %c0_i32, %c0_i32_0 : i32, i32
  }
  func.func @transform_6(%arg0: i32) -> (i32, i32) {
    %c0_i32 = arith.constant 0 : i32
    %c0_i32_0 = arith.constant 0 : i32
    %c0_i32_1 = arith.constant 0 : i32
    return %c0_i32, %c0_i32_0 : i32, i32
  }
  func.func @transform_7(%arg0: i32) -> (i32, i32) {
    %c0_i32 = arith.constant 0 : i32
    %c0_i32_0 = arith.constant 0 : i32
    %c0_i32_1 = arith.constant 0 : i32
    return %c0_i32, %c0_i32_0 : i32, i32
  }
  func.func @transform_8(%arg0: i32) -> (i32, i32) {
    %c0_i32 = arith.constant 0 : i32
    %c0_i32_0 = arith.constant 0 : i32
    %c0_i32_1 = arith.constant 0 : i32
    return %c0_i32, %c0_i32_0 : i32, i32
  }
  func.func @transform_9(%arg0: i32) -> (i32, i32) {
    %c0_i32 = arith.constant 0 : i32
    %c0_i32_0 = arith.constant 0 : i32
    %c0_i32_1 = arith.constant 0 : i32
    return %c0_i32, %c0_i32_0 : i32, i32
  }
  func.func @transform_10(%arg0: i32) -> i32 {
    %c0_i32 = arith.constant 0 : i32
    %c0_i32_0 = arith.constant 0 : i32
    return %c0_i32 : i32
  }
  func.func @transform_11(%arg0: i32) -> (i32, i32) {
    %c0_i32 = arith.constant 0 : i32
    %c0_i32_0 = arith.constant 0 : i32
    return %arg0, %c0_i32 : i32, i32
  }
}

</mosaic_0001>

<llo_original>
// kernel: tpu_custom_call.1
$region0: #{tpu_custom_call.1}
  #allocation0 [shape = 'u32[]', space=smem, size = 0x4, offset = 0x4, fixed_abs, tag = 'smem constant byte address 0x4 - core index']
  #allocation1 [shape = 'u32[144,128]{1,0:T(1,128)}', space=vmem, size = 0x12000, scoped, tag = 'internal scratch']
  #allocation2 [shape = 'f32[1]{0:T(128)S(6)}', space=smem, size = 0x200, scoped, tag = 'scoped memory for tpu_custom_call.1']
  %s0 = inlined_call_operand.hbm [shape: bf16[16,18], index: 0, kind: input, shape index: {}]
  %s1 = inlined_call_operand.vmem [shape: bf16[16,6], index: 1, kind: input, shape index: {}]
  %s2 = inlined_call_operand.hbm [shape: bf16[18,1024], index: 2, kind: input, shape index: {}]
  %s3 = inlined_call_operand.hbm [shape: f32[1,1024], index: 3, kind: input, shape index: {}]
  %s4 = inlined_call_operand.hbm [shape: bf16[1024,512], index: 4, kind: input, shape index: {}]
  %s5 = inlined_call_operand.vmem [shape: bf16[6,512], index: 5, kind: input, shape index: {}]
  %s6 = inlined_call_operand.vmem [shape: f32[1,512], index: 6, kind: input, shape index: {}]
  %s7 = inlined_call_operand.hbm [shape: bf16[512,256], index: 7, kind: input, shape index: {}]
  %s8 = inlined_call_operand.vmem [shape: f32[1,256], index: 8, kind: input, shape index: {}]
  %s9 = inlined_call_operand.vmem [shape: bf16[1,256], index: 9, kind: input, shape index: {}]
  %s10 = inlined_call_operand.<no memory space> [shape: f32[1], index: 10, kind: input, shape index: {}]
  %s11 = inlined_call_operand.hbm [shape: f32[16,128], index: 11, kind: output, shape index: {}]
  %s12 = sld [smem:[#allocation0]]
  $region74: #{tpu_custom_call.1} parent=0
    _
  %s14 = ssub.s32 1, %s12
  %s15 = scalar_select 0, %s14, %s12
  %16 = sst [smem:[#allocation2]] %s10
  $region1: #{tpu_custom_call.1} parent=0
    #allocation3 [shape = 'u8[4096]{0}', space=vmem, size = 0x1000, scoped, tag = 'input window, operand 0, single buffered']
    #allocation4 [shape = 's32[1]{0}', space=sflag, size = 0x4, scoped, tag = 'scoped memory for tpu_custom_call.1']
    #allocation5 [shape = 's32[1]{0}', space=sflag, size = 0x4, scoped, tag = 'scoped memory for tpu_custom_call.1']
    #allocation6 [shape = 'u8[49152]{0}', space=vmem, size = 0xc000, scoped, tag = 'input window, operand 2, single buffered']
    #allocation7 [shape = 's32[1]{0}', space=sflag, size = 0x4, scoped, tag = 'scoped memory for tpu_custom_call.1']
    #allocation8 [shape = 'u8[4096]{0}', space=vmem, size = 0x1000, scoped, tag = 'input window, operand 3, single buffered']
    #allocation9 [shape = 'u8[1048576]{0}', space=vmem, size = 0x100000, scoped, tag = 'input window, operand 4, single buffered']
    #allocation10 [shape = 's32[1]{0}', space=sflag, size = 0x4, scoped, tag = 'scoped memory for tpu_custom_call.1']
    #allocation11 [shape = 'u8[262144]{0}', space=vmem, size = 0x40000, scoped, tag = 'input window, operand 7, single buffered']
    #allocation12 [shape = 'u8[8192]{0}', space=vmem, size = 0x2000, scoped, tag = 'output window, operand 0, single buffered']
    %17 = vsyncpa [#allocation4], 0
    %18 = vsyncpa [#allocation7], 0
    %19 = vsyncpa [#allocation10], 0
    %20 = vsyncpa [#allocation5], 0
    // Predicated region
    $region2: #{tpu_custom_call.1} parent=1 // pred_check
      _
    $region3: #{tpu_custom_call.1} parent=1 // pred_check_branch
      %22 = sbr.rel (0) target = $region5
    $region4: #{tpu_custom_call.1} parent=1 // pred_region
      %s24 = ssub.s32 128, 128
      %25 = vsyncadd [#allocation4], %s24
      %s26 = sshll.u32 [#allocation3], 4
      %s27 = int_to_ptr.vmem [resolvable:$true] %s26
      %32 = dma.hbm_to_vmem [thread:$0]  %s0, 128, %s27, [#allocation4], 64, 64, 4
    $region5: #{tpu_custom_call.1} parent=1 // pred_fallthru
      _
    // Predicated region
    $region6: #{tpu_custom_call.1} parent=1 // pred_check
      _
    $region7: #{tpu_custom_call.1} parent=1 // pred_check_branch
      %34 = sbr.rel (0) target = $region9
    $region8: #{tpu_custom_call.1} parent=1 // pred_region
      _
    $region9: #{tpu_custom_call.1} parent=1 // pred_fallthru
      _
    // Predicated region
    $region10: #{tpu_custom_call.1} parent=1 // pred_check
      _
    $region11: #{tpu_custom_call.1} parent=1 // pred_check_branch
      %36 = sbr.rel (0) target = $region13
    $region12: #{tpu_custom_call.1} parent=1 // pred_region
      %s38 = ssub.s32 1536, 1536
      %39 = vsyncadd [#allocation7], %s38
      %s40 = sshll.u32 [#allocation6], 4
      %s41 = int_to_ptr.vmem [resolvable:$true] %s40
      %46 = dma.hbm_to_vmem [thread:$0]  %s2, 1536, %s41, [#allocation7], 512, 512, 32
    $region13: #{tpu_custom_call.1} parent=1 // pred_fallthru
      _
    // Predicated region
    $region14: #{tpu_custom_call.1} parent=1 // pred_check
      _
    $region15: #{tpu_custom_call.1} parent=1 // pred_check_branch
      %48 = sbr.rel (0) target = $region17
    $region16: #{tpu_custom_call.1} parent=1 // pred_region
      %s50 = ssub.s32 128, 128
      %51 = vsyncadd [#allocation7], %s50
      %s53 = sshll.u32 [#allocation8], 4
      %s54 = int_to_ptr.vmem [resolvable:$true] %s53
      %56 = dma.hbm_to_vmem [thread:$0]  %s3, 128, %s54, [#allocation7]
    $region17: #{tpu_custom_call.1} parent=1 // pred_fallthru
      _
    // Predicated region
    $region18: #{tpu_custom_call.1} parent=1 // pred_check
      _
    $region19: #{tpu_custom_call.1} parent=1 // pred_check_branch
      %58 = sbr.rel (0) target = $region21
    $region20: #{tpu_custom_call.1} parent=1 // pred_region
      %s60 = ssub.s32 32768, 32768
      %61 = vsyncadd [#allocation10], %s60
      %s62 = sshll.u32 [#allocation9], 4
      %s63 = int_to_ptr.vmem [resolvable:$true] %s62
      %68 = dma.hbm_to_vmem [thread:$0]  %s4, 32768, %s63, [#allocation10], 256, 256, 16
    $region21: #{tpu_custom_call.1} parent=1 // pred_fallthru
      _
    // Predicated region
    $region22: #{tpu_custom_call.1} parent=1 // pred_check
      _
    $region23: #{tpu_custom_call.1} parent=1 // pred_check_branch
      %70 = sbr.rel (0) target = $region25
    $region24: #{tpu_custom_call.1} parent=1 // pred_region
      _
    $region25: #{tpu_custom_call.1} parent=1 // pred_fallthru
      _
    // Predicated region
    $region26: #{tpu_custom_call.1} parent=1 // pred_check
      _
    $region27: #{tpu_custom_call.1} parent=1 // pred_check_branch
      %72 = sbr.rel (0) target = $region29
    $region28: #{tpu_custom_call.1} parent=1 // pred_region
      _
    $region29: #{tpu_custom_call.1} parent=1 // pred_fallthru
      _
    // Predicated region
    $region30: #{tpu_custom_call.1} parent=1 // pred_check
      _
    $region31: #{tpu_custom_call.1} parent=1 // pred_check_branch
      %74 = sbr.rel (0) target = $region33
    $region32: #{tpu_custom_call.1} parent=1 // pred_region
      %s76 = ssub.s32 8192, 8192
      %77 = vsyncadd [#allocation10], %s76
      %s78 = sshll.u32 [#allocation11], 4
      %s79 = int_to_ptr.vmem [resolvable:$true] %s78
      %84 = dma.hbm_to_vmem [thread:$0]  %s7, 8192, %s79, [#allocation10], 128, 128, 8
    $region33: #{tpu_custom_call.1} parent=1 // pred_fallthru
      _
    // Predicated region
    $region34: #{tpu_custom_call.1} parent=1 // pred_check
      _
    $region35: #{tpu_custom_call.1} parent=1 // pred_check_branch
      %86 = sbr.rel (0) target = $region37
    $region36: #{tpu_custom_call.1} parent=1 // pred_region
      _
    $region37: #{tpu_custom_call.1} parent=1 // pred_fallthru
      _
    // Predicated region
    $region38: #{tpu_custom_call.1} parent=1 // pred_check
      _
    $region39: #{tpu_custom_call.1} parent=1 // pred_check_branch
      %88 = sbr.rel (0) target = $region41
    $region40: #{tpu_custom_call.1} parent=1 // pred_region
      _
    $region41: #{tpu_custom_call.1} parent=1 // pred_fallthru
      _
    // Predicated region
    $region42: #{tpu_custom_call.1} parent=1 // pred_check
      _
    $region43: #{tpu_custom_call.1} parent=1 // pred_check_branch
      %90 = sbr.rel (0) target = $region45
    $region44: #{tpu_custom_call.1} parent=1 // pred_region
      _
    $region45: #{tpu_custom_call.1} parent=1 // pred_fallthru
      _
    // Predicated region
    $region46: #{tpu_custom_call.1} parent=1 // pred_check
      _
    $region47: #{tpu_custom_call.1} parent=1 // pred_check_branch
      %92 = sbr.rel (0) target = $region49
    $region48: #{tpu_custom_call.1} parent=1 // pred_region
      %93 = dma.done [#allocation4], 128
    $region49: #{tpu_custom_call.1} parent=1 // pred_fallthru
      _
    // Predicated region
    $region50: #{tpu_custom_call.1} parent=1 // pred_check
      _
    $region51: #{tpu_custom_call.1} parent=1 // pred_check_branch
      %95 = sbr.rel (0) target = $region53
    $region52: #{tpu_custom_call.1} parent=1 // pred_region
      %96 = dma.done [#allocation7], 1536
    $region53: #{tpu_custom_call.1} parent=1 // pred_fallthru
      _
    // Predicated region
    $region54: #{tpu_custom_call.1} parent=1 // pred_check
      _
    $region55: #{tpu_custom_call.1} parent=1 // pred_check_branch
      %98 = sbr.rel (0) target = $region57
    $region56: #{tpu_custom_call.1} parent=1 // pred_region
      %99 = dma.done [#allocation7], 128
    $region57: #{tpu_custom_call.1} parent=1 // pred_fallthru
      _
    // Predicated region
    $region58: #{tpu_custom_call.1} parent=1 // pred_check
      _
    $region59: #{tpu_custom_call.1} parent=1 // pred_check_branch
      %101 = sbr.rel (0) target = $region61
    $region60: #{tpu_custom_call.1} parent=1 // pred_region
      %102 = dma.done [#allocation10], 32768
    $region61: #{tpu_custom_call.1} parent=1 // pred_fallthru
      _
    // Predicated region
    $region62: #{tpu_custom_call.1} parent=1 // pred_check
      _
    $region63: #{tpu_custom_call.1} parent=1 // pred_check_branch
      %104 = sbr.rel (0) target = $region65
    $region64: #{tpu_custom_call.1} parent=1 // pred_region
      %105 = dma.done [#allocation10], 8192
    $region65: #{tpu_custom_call.1} parent=1 // pred_fallthru
      _
    %v107 = vld [vmem:[#allocation3] sm:$0xf]
    %v108 = vld [vmem:[#allocation3 + $0x4] sm:$0xf]
    %v109 = vld [vmem:[#allocation6] sm:$0xff]
    %v110 = vld [vmem:[#allocation6 + $0x8] sm:$0xff]
    %v111 = vld [vmem:[#allocation6 + $0x10] sm:$0xff]
    %v112 = vld [vmem:[#allocation6 + $0x18] sm:$0xff]
    %v113 = vld [vmem:[#allocation6 + $0x20] sm:$0xff]
    %v114 = vld [vmem:[#allocation6 + $0x28] sm:$0xff]
    %v115 = vld [vmem:[#allocation6 + $0x30] sm:$0xff]
    %v116 = vld [vmem:[#allocation6 + $0x38] sm:$0xff]
    %v117 = vld [vmem:[#allocation6 + $0x40] sm:$0x11]
    %v118 = vld [vmem:[#allocation6 + $0x48] sm:$0x11]
    %v119 = vld [vmem:[#allocation6 + $0x50] sm:$0x11]
    %v120 = vld [vmem:[#allocation6 + $0x58] sm:$0x11]
    %v121 = vld [vmem:[#allocation8] sm:$0xff]
    %v123 = vlaneseq
    %v124 = vshrl.u32 %v123, 7
    %v125 = vsub.s32 0, %v124
    %v126 = vrot.slane %v121, %v125
    %v127 = vlaneseq
    %v128 = vshrl.u32 %v127, 7
    %v129 = vsub.s32 1, %v128
    %v130 = vrot.slane %v121, %v129
    %v131 = vlaneseq
    %v132 = vshrl.u32 %v131, 7
    %v133 = vsub.s32 2, %v132
    %v134 = vrot.slane %v121, %v133
    %v135 = vlaneseq
    %v136 = vshrl.u32 %v135, 7
    %v137 = vsub.s32 3, %v136
    %v138 = vrot.slane %v121, %v137
    %v139 = vlaneseq
    %v140 = vshrl.u32 %v139, 7
    %v141 = vsub.s32 4, %v140
    %v142 = vrot.slane %v121, %v141
    %v143 = vlaneseq
    %v144 = vshrl.u32 %v143, 7
    %v145 = vsub.s32 5, %v144
    %v146 = vrot.slane %v121, %v145
    %v147 = vlaneseq
    %v148 = vshrl.u32 %v147, 7
    %v149 = vsub.s32 6, %v148
    %v150 = vrot.slane %v121, %v149
    %v151 = vlaneseq
    %v152 = vshrl.u32 %v151, 7
    %v153 = vsub.s32 7, %v152
    %v154 = vrot.slane %v121, %v153
    %v165 = vunpack.c.l.b16 %v107
    %v166 = vunpack.c.l.b16 %v108
    %v167 = vpack.c.b16 %v166, %v165
    %v180 = vunpack.c.l.b16 %v109
    %v181 = vunpack.c.h.b16 %v109
    %v182 = vunpack.c.l.b16 %v110
    %v183 = vunpack.c.h.b16 %v110
    %v184 = vunpack.c.l.b16 %v111
    %v185 = vunpack.c.h.b16 %v111
    %v186 = vunpack.c.l.b16 %v112
    %v187 = vunpack.c.h.b16 %v112
    %v188 = vunpack.c.l.b16 %v113
    %v189 = vunpack.c.h.b16 %v113
    %v190 = vunpack.c.l.b16 %v114
    %v191 = vunpack.c.h.b16 %v114
    %v192 = vunpack.c.l.b16 %v115
    %v193 = vunpack.c.h.b16 %v115
    %v194 = vunpack.c.l.b16 %v116
    %v195 = vunpack.c.h.b16 %v116
    %v196 = vunpack.c.l.b16 %v117
    %v197 = vunpack.c.h.b16 %v117
    %v198 = vunpack.c.l.b16 %v118
    %v199 = vunpack.c.h.b16 %v118
    %v200 = vunpack.c.l.b16 %v119
    %v201 = vunpack.c.h.b16 %v119
    %v202 = vunpack.c.l.b16 %v120
    %v203 = vunpack.c.h.b16 %v120
    %v204 = vpack.c.b16 %v188, %v180
    %v205 = vpack.c.b16 %v189, %v181
    %v206 = vpack.c.b16 %v190, %v182
    %v207 = vpack.c.b16 %v191, %v183
    %v208 = vpack.c.b16 %v192, %v184
    %v209 = vpack.c.b16 %v193, %v185
    %v210 = vpack.c.b16 %v194, %v186
    %v211 = vpack.c.b16 %v195, %v187
    %v212 = vpack.c.b16 %v196, %v196
    %v213 = vpack.c.b16 %v197, %v197
    %v214 = vpack.c.b16 %v198, %v198
    %v215 = vpack.c.b16 %v199, %v199
    %v216 = vpack.c.b16 %v200, %v200
    %v217 = vpack.c.b16 %v201, %v201
    %v218 = vpack.c.b16 %v202, %v202
    %v219 = vpack.c.b16 %v203, %v203
    %vm228 = vcmask 146432
    %v230 = vsel %vm228, %v167, 0
    %vm232 = vcmask 1040384
    %v234 = vsel %vm232, %v212, 0
    %v237 = vsel %vm232, %v213, 0
    %v240 = vsel %vm232, %v214, 0
    %v243 = vsel %vm232, %v215, 0
    %v246 = vsel %vm232, %v216, 0
    %v249 = vsel %vm232, %v217, 0
    %v252 = vsel %vm232, %v218, 0
    %v255 = vsel %vm232, %v219, 0
    %257 = vmatprep.subr.bf16.mxu0 0
    %258 = vmatpush1.bf16.msra.mxu0 0
    %259 = vmatprep.subr.bf16.mxu0 0
    %260 = vmatpush1.bf16.msra.mxu0 0
    %261 = vmatprep.subr.bf16.mxu0 0
    %262 = vmatpush1.bf16.msra.mxu0 0
    %263 = vmatprep.subr.bf16.mxu0 0
    %264 = vmatpush1.bf16.msra.mxu0 0
    %265 = vmatprep.subr.bf16.mxu0 0
    %266 = vmatpush1.bf16.msra.mxu0 0
    %267 = vmatprep.subr.bf16.mxu0 0
    %268 = vmatpush1.bf16.msra.mxu0 0
    %269 = vmatprep.subr.bf16.mxu0 %v237
    %270 = vmatpush1.bf16.msra.mxu0 %v234
    %271 = vmatprep.subr.bf16.mxu0 %v205
    %272 = vmatpush1.bf16.msra.mxu0 %v204
    %273 = vmatprep.subr.bf16.mxu0 0
    %274 = vmatpush2.bf16.msra.mxu0 0
    %275 = vmatprep.subr.bf16.mxu0 0
    %276 = vmatpush2.bf16.msra.mxu0 0
    %277 = vmatprep.subr.bf16.mxu0 0
    %278 = vmatpush2.bf16.msra.mxu0 0
    %279 = vmatprep.subr.bf16.mxu0 0
    %280 = vmatpush2.bf16.msra.mxu0 0
    %281 = vmatprep.subr.bf16.mxu0 0
    %282 = vmatpush2.bf16.msra.mxu0 0
    %283 = vmatprep.subr.bf16.mxu0 0
    %284 = vmatpush2.bf16.msra.mxu0 0
    %285 = vmatprep.subr.bf16.mxu0 0
    %286 = vmatpush2.bf16.msra.mxu0 0
    %287 = vmatprep.subr.bf16.mxu0 0
    %288 = vmatpush2.bf16.msra.mxu0 0
    %289 = vmatprep.mubr.bf16.mxu0 0
    %290 = vmatmul.mubr.bf16.gmra.mxu0 %v230
    %v291 = vpop.f32.mrf.mxu0
    %v292 = vadd.f32 %v126, %v291
    %v293 = vpop.f32.mrf.mxu0
    %v294 = vadd.f32 %v130, %v293
    %v295 = vpop.f32.mrf.mxu0
    %v296 = vadd.f32 %v126, %v295
    %v297 = vpop.f32.mrf.mxu0
    %v298 = vadd.f32 %v130, %v297
    %299 = vdwg.mxu0
    %300 = vmatprep.subr.bf16.mxu0 0
    %301 = vmatpush1.bf16.msra.mxu0 0
    %302 = vmatprep.subr.bf16.mxu0 0
    %303 = vmatpush1.bf16.msra.mxu0 0
    %304 = vmatprep.subr.bf16.mxu0 0
    %305 = vmatpush1.bf16.msra.mxu0 0
    %306 = vmatprep.subr.bf16.mxu0 0
    %307 = vmatpush1.bf16.msra.mxu0 0
    %308 = vmatprep.subr.bf16.mxu0 0
    %309 = vmatpush1.bf16.msra.mxu0 0
    %310 = vmatprep.subr.bf16.mxu0 0
    %311 = vmatpush1.bf16.msra.mxu0 0
    %312 = vmatprep.subr.bf16.mxu0 %v243
    %313 = vmatpush1.bf16.msra.mxu0 %v240
    %314 = vmatprep.subr.bf16.mxu0 %v207
    %315 = vmatpush1.bf16.msra.mxu0 %v206
    %316 = vmatprep.subr.bf16.mxu0 0
    %317 = vmatpush2.bf16.msra.mxu0 0
    %318 = vmatprep.subr.bf16.mxu0 0
    %319 = vmatpush2.bf16.msra.mxu0 0
    %320 = vmatprep.subr.bf16.mxu0 0
    %321 = vmatpush2.bf16.msra.mxu0 0
    %322 = vmatprep.subr.bf16.mxu0 0
    %323 = vmatpush2.bf16.msra.mxu0 0
    %324 = vmatprep.subr.bf16.mxu0 0
    %325 = vmatpush2.bf16.msra.mxu0 0
    %326 = vmatprep.subr.bf16.mxu0 0
    %327 = vmatpush2.bf16.msra.mxu0 0
    %328 = vmatprep.subr.bf16.mxu0 0
    %329 = vmatpush2.bf16.msra.mxu0 0
    %330 = vmatprep.subr.bf16.mxu0 0
    %331 = vmatpush2.bf16.msra.mxu0 0
    %332 = vmatprep.mubr.bf16.mxu0 0
    %333 = vmatmul.mubr.bf16.gmra.mxu0 %v230
    %v334 = vpop.f32.mrf.mxu0
    %v335 = vadd.f32 %v134, %v334
    %v336 = vpop.f32.mrf.mxu0
    %v337 = vadd.f32 %v138, %v336
    %v338 = vpop.f32.mrf.mxu0
    %v339 = vadd.f32 %v134, %v338
    %v340 = vpop.f32.mrf.mxu0
    %v341 = vadd.f32 %v138, %v340
    %342 = vdwg.mxu0
    %343 = vmatprep.subr.bf16.mxu0 0
    %344 = vmatpush1.bf16.msra.mxu0 0
    %345 = vmatprep.subr.bf16.mxu0 0
    %346 = vmatpush1.bf16.msra.mxu0 0
    %347 = vmatprep.subr.bf16.mxu0 0
    %348 = vmatpush1.bf16.msra.mxu0 0
    %349 = vmatprep.subr.bf16.mxu0 0
    %350 = vmatpush1.bf16.msra.mxu0 0
    %351 = vmatprep.subr.bf16.mxu0 0
    %352 = vmatpush1.bf16.msra.mxu0 0
    %353 = vmatprep.subr.bf16.mxu0 0
    %354 = vmatpush1.bf16.msra.mxu0 0
    %355 = vmatprep.subr.bf16.mxu0 %v249
    %356 = vmatpush1.bf16.msra.mxu0 %v246
    %357 = vmatprep.subr.bf16.mxu0 %v209
    %358 = vmatpush1.bf16.msra.mxu0 %v208
    %359 = vmatprep.subr.bf16.mxu0 0
    %360 = vmatpush2.bf16.msra.mxu0 0
    %361 = vmatprep.subr.bf16.mxu0 0
    %362 = vmatpush2.bf16.msra.mxu0 0
    %363 = vmatprep.subr.bf16.mxu0 0
    %364 = vmatpush2.bf16.msra.mxu0 0
    %365 = vmatprep.subr.bf16.mxu0 0
    %366 = vmatpush2.bf16.msra.mxu0 0
    %367 = vmatprep.subr.bf16.mxu0 0
    %368 = vmatpush2.bf16.msra.mxu0 0
    %369 = vmatprep.subr.bf16.mxu0 0
    %370 = vmatpush2.bf16.msra.mxu0 0
    %371 = vmatprep.subr.bf16.mxu0 0
    %372 = vmatpush2.bf16.msra.mxu0 0
    %373 = vmatprep.subr.bf16.mxu0 0
    %374 = vmatpush2.bf16.msra.mxu0 0
    %375 = vmatprep.mubr.bf16.mxu0 0
    %376 = vmatmul.mubr.bf16.gmra.mxu0 %v230
    %v377 = vpop.f32.mrf.mxu0
    %v378 = vadd.f32 %v142, %v377
    %v379 = vpop.f32.mrf.mxu0
    %v380 = vadd.f32 %v146, %v379
    %v381 = vpop.f32.mrf.mxu0
    %v382 = vadd.f32 %v142, %v381
    %v383 = vpop.f32.mrf.mxu0
    %v384 = vadd.f32 %v146, %v383
    %385 = vdwg.mxu0
    %386 = vmatprep.subr.bf16.mxu0 0
    %387 = vmatpush1.bf16.msra.mxu0 0
    %388 = vmatprep.subr.bf16.mxu0 0
    %389 = vmatpush1.bf16.msra.mxu0 0
    %390 = vmatprep.subr.bf16.mxu0 0
    %391 = vmatpush1.bf16.msra.mxu0 0
    %392 = vmatprep.subr.bf16.mxu0 0
    %393 = vmatpush1.bf16.msra.mxu0 0
    %394 = vmatprep.subr.bf16.mxu0 0
    %395 = vmatpush1.bf16.msra.mxu0 0
    %396 = vmatprep.subr.bf16.mxu0 0
    %397 = vmatpush1.bf16.msra.mxu0 0
    %398 = vmatprep.subr.bf16.mxu0 %v255
    %399 = vmatpush1.bf16.msra.mxu0 %v252
    %400 = vmatprep.subr.bf16.mxu0 %v211
    %401 = vmatpush1.bf16.msra.mxu0 %v210
    %402 = vmatprep.subr.bf16.mxu0 0
    %403 = vmatpush2.bf16.msra.mxu0 0
    %404 = vmatprep.subr.bf16.mxu0 0
    %405 = vmatpush2.bf16.msra.mxu0 0
    %406 = vmatprep.subr.bf16.mxu0 0
    %407 = vmatpush2.bf16.msra.mxu0 0
    %408 = vmatprep.subr.bf16.mxu0 0
    %409 = vmatpush2.bf16.msra.mxu0 0
    %410 = vmatprep.subr.bf16.mxu0 0
    %411 = vmatpush2.bf16.msra.mxu0 0
    %412 = vmatprep.subr.bf16.mxu0 0
    %413 = vmatpush2.bf16.msra.mxu0 0
    %414 = vmatprep.subr.bf16.mxu0 0
    %415 = vmatpush2.bf16.msra.mxu0 0
    %416 = vmatprep.subr.bf16.mxu0 0
    %417 = vmatpush2.bf16.msra.mxu0 0
    %418 = vmatprep.mubr.bf16.mxu0 0
    %419 = vmatmul.mubr.bf16.gmra.mxu0 %v230
    %v420 = vpop.f32.mrf.mxu0
    %v421 = vadd.f32 %v150, %v420
    %v422 = vpop.f32.mrf.mxu0
    %v423 = vadd.f32 %v154, %v422
    %v424 = vpop.f32.mrf.mxu0
    %v425 = vadd.f32 %v150, %v424
    %v426 = vpop.f32.mrf.mxu0
    %v427 = vadd.f32 %v154, %v426
    %428 = vdwg.mxu0
    %v429 = vmax.f32 %v292, 0.0
    %v430 = vmax.f32 %v294, 0.0
    %v431 = vmax.f32 %v335, 0.0
    %v432 = vmax.f32 %v337, 0.0
    %v433 = vmax.f32 %v378, 0.0
    %v434 = vmax.f32 %v380, 0.0
    %v435 = vmax.f32 %v421, 0.0
    %v436 = vmax.f32 %v423, 0.0
    %v437 = vmax.f32 %v296, 0.0
    %v438 = vmax.f32 %v298, 0.0
    %v439 = vmax.f32 %v339, 0.0
    %v440 = vmax.f32 %v341, 0.0
    %v441 = vmax.f32 %v382, 0.0
    %v442 = vmax.f32 %v384, 0.0
    %v443 = vmax.f32 %v425, 0.0
    %v444 = vmax.f32 %v427, 0.0
    %v445 = vpack.c.bf16 %v437, %v429
    %v446 = vpack.c.bf16 %v438, %v430
    %v447 = vpack.c.bf16 %v439, %v431
    %v448 = vpack.c.bf16 %v440, %v432
    %v449 = vpack.c.bf16 %v441, %v433
    %v450 = vpack.c.bf16 %v442, %v434
    %v451 = vpack.c.bf16 %v443, %v435
    %v452 = vpack.c.bf16 %v444, %v436
    %v453 = vld [vmem:[#allocation9] sm:$0xff]
    %v454 = vld [vmem:[#allocation9 + $0x8] sm:$0xff]
    %v455 = vld [vmem:[#allocation9 + $0x10] sm:$0xff]
    %v456 = vld [vmem:[#allocation9 + $0x18] sm:$0xff]
    %v457 = vld [vmem:[#allocation9 + $0x20] sm:$0xff]
    %v458 = vld [vmem:[#allocation9 + $0x28] sm:$0xff]
    %v459 = vld [vmem:[#allocation9 + $0x30] sm:$0xff]
    %v460 = vld [vmem:[#allocation9 + $0x38] sm:$0xff]
    %v461 = vld [vmem:[#allocation9 + $0x40] sm:$0xff]
    %v462 = vld [vmem:[#allocation9 + $0x48] sm:$0xff]
    %v463 = vld [vmem:[#allocation9 + $0x50] sm:$0xff]
    %v464 = vld [vmem:[#allocation9 + $0x58] sm:$0xff]
    %v465 = vld [vmem:[#allocation9 + $0x60] sm:$0xff]
    %v466 = vld [vmem:[#allocation9 + $0x68] sm:$0xff]
    %v467 = vld [vmem:[#allocation9 + $0x70] sm:$0xff]
    %v468 = vld [vmem:[#allocation9 + $0x78] sm:$0xff]
    %v469 = vld [vmem:[#allocation9 + $0x80] sm:$0xff]
    %v470 = vld [vmem:[#allocation9 + $0x88] sm:$0xff]
    %v471 = vld [vmem:[#allocation9 + $0x90] sm:$0xff]
    %v472 = vld [vmem:[#allocation9 + $0x98] sm:$0xff]
    %v473 = vld [vmem:[#allocation9 + $0xa0] sm:$0xff]
    %v474 = vld [vmem:[#allocation9 + $0xa8] sm:$0xff]
    %v475 = vld [vmem:[#allocation9 + $0xb0] sm:$0xff]
    %v476 = vld [vmem:[#allocation9 + $0xb8] sm:$0xff]
    %v477 = vld [vmem:[#allocation9 + $0xc0] sm:$0xff]
    %v478 = vld [vmem:[#allocation9 + $0xc8] sm:$0xff]
    %v479 = vld [vmem:[#allocation9 + $0xd0] sm:$0xff]
    %v480 = vld [vmem:[#allocation9 + $0xd8] sm:$0xff]
    %v481 = vld [vmem:[#allocation9 + $0xe0] sm:$0xff]
    %v482 = vld [vmem:[#allocation9 + $0xe8] sm:$0xff]
    %v483 = vld [vmem:[#allocation9 + $0xf0] sm:$0xff]
    %v484 = vld [vmem:[#allocation9 + $0xf8] sm:$0xff]
    %v485 = vld [vmem:[#allocation9 + $0x100] sm:$0xff]
    %v486 = vld [vmem:[#allocation9 + $0x108] sm:$0xff]
    %v487 = vld [vmem:[#allocation9 + $0x110] sm:$0xff]
    %v488 = vld [vmem:[#allocation9 + $0x118] sm:$0xff]
    %v489 = vld [vmem:[#allocation9 + $0x120] sm:$0xff]
    %v490 = vld [vmem:[#allocation9 + $0x128] sm:$0xff]
    %v491 = vld [vmem:[#allocation9 + $0x130] sm:$0xff]
    %v492 = vld [vmem:[#allocation9 + $0x138] sm:$0xff]
    %v493 = vld [vmem:[#allocation9 + $0x140] sm:$0xff]
    %v494 = vld [vmem:[#allocation9 + $0x148] sm:$0xff]
    %v495 = vld [vmem:[#allocation9 + $0x150] sm:$0xff]
    %v496 = vld [vmem:[#allocation9 + $0x158] sm:$0xff]
    %v497 = vld [vmem:[#allocation9 + $0x160] sm:$0xff]
    %v498 = vld [vmem:[#allocation9 + $0x168] sm:$0xff]
    %v499 = vld [vmem:[#allocation9 + $0x170] sm:$0xff]
    %v500 = vld [vmem:[#allocation9 + $0x178] sm:$0xff]
    %v501 = vld [vmem:[#allocation9 + $0x180] sm:$0xff]
    %v502 = vld [vmem:[#allocation9 + $0x188] sm:$0xff]
    %v503 = vld [vmem:[#allocation9 + $0x190] sm:$0xff]
    %v504 = vld [vmem:[#allocation9 + $0x198] sm:$0xff]
    %v505 = vld [vmem:[#allocation9 + $0x1a0] sm:$0xff]
    %v506 = vld [vmem:[#allocation9 + $0x1a8] sm:$0xff]
    %v507 = vld [vmem:[#allocation9 + $0x1b0] sm:$0xff]
    %v508 = vld [vmem:[#allocation9 + $0x1b8] sm:$0xff]
    %v509 = vld [vmem:[#allocation9 + $0x1c0] sm:$0xff]
    %v510 = vld [vmem:[#allocation9 + $0x1c8] sm:$0xff]
    %v511 = vld [vmem:[#allocation9 + $0x1d0] sm:$0xff]
    %v512 = vld [vmem:[#allocation9 + $0x1d8] sm:$0xff]
    %v513 = vld [vmem:[#allocation9 + $0x1e0] sm:$0xff]
    %v514 = vld [vmem:[#allocation9 + $0x1e8] sm:$0xff]
    %v515 = vld [vmem:[#allocation9 + $0x1f0] sm:$0xff]
    %v516 = vld [vmem:[#allocation9 + $0x1f8] sm:$0xff]
    %v517 = vld [vmem:[#allocation9 + $0x200] sm:$0xff]
    %v518 = vld [vmem:[#allocation9 + $0x208] sm:$0xff]
    %v519 = vld [vmem:[#allocation9 + $0x210] sm:$0xff]
    %v520 = vld [vmem:[#allocation9 + $0x218] sm:$0xff]
    %v521 = vld [vmem:[#allocation9 + $0x220] sm:$0xff]
    %v522 = vld [vmem:[#allocation9 + $0x228] sm:$0xff]
    %v523 = vld [vmem:[#allocation9 + $0x230] sm:$0xff]
    %v524 = vld [vmem:[#allocation9 + $0x238] sm:$0xff]
    %v525 = vld [vmem:[#allocation9 + $0x240] sm:$0xff]
    %v526 = vld [vmem:[#allocation9 + $0x248] sm:$0xff]
    %v527 = vld [vmem:[#allocation9 + $0x250] sm:$0xff]
    %v528 = vld [vmem:[#allocation9 + $0x258] sm:$0xff]
    %v529 = vld [vmem:[#allocation9 + $0x260] sm:$0xff]
    %v530 = vld [vmem:[#allocation9 + $0x268] sm:$0xff]
    %v531 = vld [vmem:[#allocation9 + $0x270] sm:$0xff]
    %v532 = vld [vmem:[#allocation9 + $0x278] sm:$0xff]
    %v533 = vld [vmem:[#allocation9 + $0x280] sm:$0xff]
    %v534 = vld [vmem:[#allocation9 + $0x288] sm:$0xff]
    %v535 = vld [vmem:[#allocation9 + $0x290] sm:$0xff]
    %v536 = vld [vmem:[#allocation9 + $0x298] sm:$0xff]
    %v537 = vld [vmem:[#allocation9 + $0x2a0] sm:$0xff]
    %v538 = vld [vmem:[#allocation9 + $0x2a8] sm:$0xff]
    %v539 = vld [vmem:[#allocation9 + $0x2b0] sm:$0xff]
    %v540 = vld [vmem:[#allocation9 + $0x2b8] sm:$0xff]
    %v541 = vld [vmem:[#allocation9 + $0x2c0] sm:$0xff]
    %v542 = vld [vmem:[#allocation9 + $0x2c8] sm:$0xff]
    %v543 = vld [vmem:[#allocation9 + $0x2d0] sm:$0xff]
    %v544 = vld [vmem:[#allocation9 + $0x2d8] sm:$0xff]
    %v545 = vld [vmem:[#allocation9 + $0x2e0] sm:$0xff]
    %v546 = vld [vmem:[#allocation9 + $0x2e8] sm:$0xff]
    %v547 = vld [vmem:[#allocation9 + $0x2f0] sm:$0xff]
    %v548 = vld [vmem:[#allocation9 + $0x2f8] sm:$0xff]
    %v549 = vld [vmem:[#allocation9 + $0x300] sm:$0xff]
    %v550 = vld [vmem:[#allocation9 + $0x308] sm:$0xff]
    %v551 = vld [vmem:[#allocation9 + $0x310] sm:$0xff]
    %v552 = vld [vmem:[#allocation9 + $0x318] sm:$0xff]
    %v553 = vld [vmem:[#allocation9 + $0x320] sm:$0xff]
    %v554 = vld [vmem:[#allocation9 + $0x328] sm:$0xff]
    %v555 = vld [vmem:[#allocation9 + $0x330] sm:$0xff]
    %v556 = vld [vmem:[#allocation9 + $0x338] sm:$0xff]
    %v557 = vld [vmem:[#allocation9 + $0x340] sm:$0xff]
    %v558 = vld [vmem:[#allocation9 + $0x348] sm:$0xff]
    %v559 = vld [vmem:[#allocation9 + $0x350] sm:$0xff]
    %v560 = vld [vmem:[#allocation9 + $0x358] sm:$0xff]
    %v561 = vld [vmem:[#allocation9 + $0x360] sm:$0xff]
    %v562 = vld [vmem:[#allocation9 + $0x368] sm:$0xff]
    %v563 = vld [vmem:[#allocation9 + $0x370] sm:$0xff]
    %v564 = vld [vmem:[#allocation9 + $0x378] sm:$0xff]
    %v565 = vld [vmem:[#allocation9 + $0x380] sm:$0xff]
    %v566 = vld [vmem:[#allocation9 + $0x388] sm:$0xff]
    %v567 = vld [vmem:[#allocation9 + $0x390] sm:$0xff]
    %v568 = vld [vmem:[#allocation9 + $0x398] sm:$0xff]
    %v569 = vld [vmem:[#allocation9 + $0x3a0] sm:$0xff]
    %v570 = vld [vmem:[#allocation9 + $0x3a8] sm:$0xff]
    %v571 = vld [vmem:[#allocation9 + $0x3b0] sm:$0xff]
    %v572 = vld [vmem:[#allocation9 + $0x3b8] sm:$0xff]
    %v573 = vld [vmem:[#allocation9 + $0x3c0] sm:$0xff]
    %v574 = vld [vmem:[#allocation9 + $0x3c8] sm:$0xff]
    %v575 = vld [vmem:[#allocation9 + $0x3d0] sm:$0xff]
    %v576 = vld [vmem:[#allocation9 + $0x3d8] sm:$0xff]
    %v577 = vld [vmem:[#allocation9 + $0x3e0] sm:$0xff]
    %v578 = vld [vmem:[#allocation9 + $0x3e8] sm:$0xff]
    %v579 = vld [vmem:[#allocation9 + $0x3f0] sm:$0xff]
    %v580 = vld [vmem:[#allocation9 + $0x3f8] sm:$0xff]
    %v581 = vld [vmem:[#allocation9 + $0x400] sm:$0xff]
    %v582 = vld [vmem:[#allocation9 + $0x408] sm:$0xff]
    %v583 = vld [vmem:[#allocation9 + $0x410] sm:$0xff]
    %v584 = vld [vmem:[#allocation9 + $0x418] sm:$0xff]
    %v585 = vld [vmem:[#allocation9 + $0x420] sm:$0xff]
    %v586 = vld [vmem:[#allocation9 + $0x428] sm:$0xff]
    %v587 = vld [vmem:[#allocation9 + $0x430] sm:$0xff]
    %v588 = vld [vmem:[#allocation9 + $0x438] sm:$0xff]
    %v589 = vld [vmem:[#allocation9 + $0x440] sm:$0xff]
    %v590 = vld [vmem:[#allocation9 + $0x448] sm:$0xff]
    %v591 = vld [vmem:[#allocation9 + $0x450] sm:$0xff]
    %v592 = vld [vmem:[#allocation9 + $0x458] sm:$0xff]
    %v593 = vld [vmem:[#allocation9 + $0x460] sm:$0xff]
    %v594 = vld [vmem:[#allocation9 + $0x468] sm:$0xff]
    %v595 = vld [vmem:[#allocation9 + $0x470] sm:$0xff]
    %v596 = vld [vmem:[#allocation9 + $0x478] sm:$0xff]
    %v597 = vld [vmem:[#allocation9 + $0x480] sm:$0xff]
    %v598 = vld [vmem:[#allocation9 + $0x488] sm:$0xff]
    %v599 = vld [vmem:[#allocation9 + $0x490] sm:$0xff]
    %v600 = vld [vmem:[#allocation9 + $0x498] sm:$0xff]
    %v601 = vld [vmem:[#allocation9 + $0x4a0] sm:$0xff]
    %v602 = vld [vmem:[#allocation9 + $0x4a8] sm:$0xff]
    %v603 = vld [vmem:[#allocation9 + $0x4b0] sm:$0xff]
    %v604 = vld [vmem:[#allocation9 + $0x4b8] sm:$0xff]
    %v605 = vld [vmem:[#allocation9 + $0x4c0] sm:$0xff]
    %v606 = vld [vmem:[#allocation9 + $0x4c8] sm:$0xff]
    %v607 = vld [vmem:[#allocation9 + $0x4d0] sm:$0xff]
    %v608 = vld [vmem:[#allocation9 + $0x4d8] sm:$0xff]
    %v609 = vld [vmem:[#allocation9 + $0x4e0] sm:$0xff]
    %v610 = vld [vmem:[#allocation9 + $0x4e8] sm:$0xff]
    %v611 = vld [vmem:[#allocation9 + $0x4f0] sm:$0xff]
    %v612 = vld [vmem:[#allocation9 + $0x4f8] sm:$0xff]
    %v613 = vld [vmem:[#allocation9 + $0x500] sm:$0xff]
    %v614 = vld [vmem:[#allocation9 + $0x508] sm:$0xff]
    %v615 = vld [vmem:[#allocation9 + $0x510] sm:$0xff]
    %v616 = vld [vmem:[#allocation9 + $0x518] sm:$0xff]
    %v617 = vld [vmem:[#allocation9 + $0x520] sm:$0xff]
    %v618 = vld [vmem:[#allocation9 + $0x528] sm:$0xff]
    %v619 = vld [vmem:[#allocation9 + $0x530] sm:$0xff]
    %v620 = vld [vmem:[#allocation9 + $0x538] sm:$0xff]
    %v621 = vld [vmem:[#allocation9 + $0x540] sm:$0xff]
    %v622 = vld [vmem:[#allocation9 + $0x548] sm:$0xff]
    %v623 = vld [vmem:[#allocation9 + $0x550] sm:$0xff]
    %v624 = vld [vmem:[#allocation9 + $0x558] sm:$0xff]
    %v625 = vld [vmem:[#allocation9 + $0x560] sm:$0xff]
    %v626 = vld [vmem:[#allocation9 + $0x568] sm:$0xff]
    %v627 = vld [vmem:[#allocation9 + $0x570] sm:$0xff]
    %v628 = vld [vmem:[#allocation9 + $0x578] sm:$0xff]
    %v629 = vld [vmem:[#allocation9 + $0x580] sm:$0xff]
    %v630 = vld [vmem:[#allocation9 + $0x588] sm:$0xff]
    %v631 = vld [vmem:[#allocation9 + $0x590] sm:$0xff]
    %v632 = vld [vmem:[#allocation9 + $0x598] sm:$0xff]
    %v633 = vld [vmem:[#allocation9 + $0x5a0] sm:$0xff]
    %v634 = vld [vmem:[#allocation9 + $0x5a8] sm:$0xff]
    %v635 = vld [vmem:[#allocation9 + $0x5b0] sm:$0xff]
    %v636 = vld [vmem:[#allocation9 + $0x5b8] sm:$0xff]
    %v637 = vld [vmem:[#allocation9 + $0x5c0] sm:$0xff]
    %v638 = vld [vmem:[#allocation9 + $0x5c8] sm:$0xff]
    %v639 = vld [vmem:[#allocation9 + $0x5d0] sm:$0xff]
    %v640 = vld [vmem:[#allocation9 + $0x5d8] sm:$0xff]
    %v641 = vld [vmem:[#allocation9 + $0x5e0] sm:$0xff]
    %v642 = vld [vmem:[#allocation9 + $0x5e8] sm:$0xff]
    %v643 = vld [vmem:[#allocation9 + $0x5f0] sm:$0xff]
    %v644 = vld [vmem:[#allocation9 + $0x5f8] sm:$0xff]
    %v645 = vld [vmem:[#allocation9 + $0x600] sm:$0xff]
    %v646 = vld [vmem:[#allocation9 + $0x608] sm:$0xff]
    %v647 = vld [vmem:[#allocation9 + $0x610] sm:$0xff]
    %v648 = vld [vmem:[#allocation9 + $0x618] sm:$0xff]
    %v649 = vld [vmem:[#allocation9 + $0x620] sm:$0xff]
    %v650 = vld [vmem:[#allocation9 + $0x628] sm:$0xff]
    %v651 = vld [vmem:[#allocation9 + $0x630] sm:$0xff]
    %v652 = vld [vmem:[#allocation9 + $0x638] sm:$0xff]
    %v653 = vld [vmem:[#allocation9 + $0x640] sm:$0xff]
    %v654 = vld [vmem:[#allocation9 + $0x648] sm:$0xff]
    %v655 = vld [vmem:[#allocation9 + $0x650] sm:$0xff]
    %v656 = vld [vmem:[#allocation9 + $0x658] sm:$0xff]
    %v657 = vld [vmem:[#allocation9 + $0x660] sm:$0xff]
    %v658 = vld [vmem:[#allocation9 + $0x668] sm:$0xff]
    %v659 = vld [vmem:[#allocation9 + $0x670] sm:$0xff]
    %v660 = vld [vmem:[#allocation9 + $0x678] sm:$0xff]
    %v661 = vld [vmem:[#allocation9 + $0x680] sm:$0xff]
    %v662 = vld [vmem:[#allocation9 + $0x688] sm:$0xff]
    %v663 = vld [vmem:[#allocation9 + $0x690] sm:$0xff]
    %v664 = vld [vmem:[#allocation9 + $0x698] sm:$0xff]
    %v665 = vld [vmem:[#allocation9 + $0x6a0] sm:$0xff]
    %v666 = vld [vmem:[#allocation9 + $0x6a8] sm:$0xff]
    %v667 = vld [vmem:[#allocation9 + $0x6b0] sm:$0xff]
    %v668 = vld [vmem:[#allocation9 + $0x6b8] sm:$0xff]
    %v669 = vld [vmem:[#allocation9 + $0x6c0] sm:$0xff]
    %v670 = vld [vmem:[#allocation9 + $0x6c8] sm:$0xff]
    %v671 = vld [vmem:[#allocation9 + $0x6d0] sm:$0xff]
    %v672 = vld [vmem:[#allocation9 + $0x6d8] sm:$0xff]
    %v673 = vld [vmem:[#allocation9 + $0x6e0] sm:$0xff]
    %v674 = vld [vmem:[#allocation9 + $0x6e8] sm:$0xff]
    %v675 = vld [vmem:[#allocation9 + $0x6f0] sm:$0xff]
    %v676 = vld [vmem:[#allocation9 + $0x6f8] sm:$0xff]
    %v677 = vld [vmem:[#allocation9 + $0x700] sm:$0xff]
    %v678 = vld [vmem:[#allocation9 + $0x708] sm:$0xff]
    %v679 = vld [vmem:[#allocation9 + $0x710] sm:$0xff]
    %v680 = vld [vmem:[#allocation9 + $0x718] sm:$0xff]
    %v681 = vld [vmem:[#allocation9 + $0x720] sm:$0xff]
    %v682 = vld [vmem:[#allocation9 + $0x728] sm:$0xff]
    %v683 = vld [vmem:[#allocation9 + $0x730] sm:$0xff]
    %v684 = vld [vmem:[#allocation9 + $0x738] sm:$0xff]
    %v685 = vld [vmem:[#allocation9 + $0x740] sm:$0xff]
    %v686 = vld [vmem:[#allocation9 + $0x748] sm:$0xff]
    %v687 = vld [vmem:[#allocation9 + $0x750] sm:$0xff]
    %v688 = vld [vmem:[#allocation9 + $0x758] sm:$0xff]
    %v689 = vld [vmem:[#allocation9 + $0x760] sm:$0xff]
    %v690 = vld [vmem:[#allocation9 + $0x768] sm:$0xff]
    %v691 = vld [vmem:[#allocation9 + $0x770] sm:$0xff]
    %v692 = vld [vmem:[#allocation9 + $0x778] sm:$0xff]
    %v693 = vld [vmem:[#allocation9 + $0x780] sm:$0xff]
    %v694 = vld [vmem:[#allocation9 + $0x788] sm:$0xff]
    %v695 = vld [vmem:[#allocation9 + $0x790] sm:$0xff]
    %v696 = vld [vmem:[#allocation9 + $0x798] sm:$0xff]
    %v697 = vld [vmem:[#allocation9 + $0x7a0] sm:$0xff]
    %v698 = vld [vmem:[#allocation9 + $0x7a8] sm:$0xff]
    %v699 = vld [vmem:[#allocation9 + $0x7b0] sm:$0xff]
    %v700 = vld [vmem:[#allocation9 + $0x7b8] sm:$0xff]
    %v701 = vld [vmem:[#allocation9 + $0x7c0] sm:$0xff]
    %v702 = vld [vmem:[#allocation9 + $0x7c8] sm:$0xff]
    %v703 = vld [vmem:[#allocation9 + $0x7d0] sm:$0xff]
    %v704 = vld [vmem:[#allocation9 + $0x7d8] sm:$0xff]
    %v705 = vld [vmem:[#allocation9 + $0x7e0] sm:$0xff]
    %v706 = vld [vmem:[#allocation9 + $0x7e8] sm:$0xff]
    %v707 = vld [vmem:[#allocation9 + $0x7f0] sm:$0xff]
    %v708 = vld [vmem:[#allocation9 + $0x7f8] sm:$0xff]
    %v709 = vld [vmem:[%s6] sm:$0xf]
    %v711 = vlaneseq
    %v712 = vshrl.u32 %v711, 7
    %v713 = vsub.s32 0, %v712
    %v714 = vrot.slane %v709, %v713
    %v715 = vlaneseq
    %v716 = vshrl.u32 %v715, 7
    %v717 = vsub.s32 1, %v716
    %v718 = vrot.slane %v709, %v717
    %v719 = vlaneseq
    %v720 = vshrl.u32 %v719, 7
    %v721 = vsub.s32 2, %v720
    %v722 = vrot.slane %v709, %v721
    %v723 = vlaneseq
    %v724 = vshrl.u32 %v723, 7
    %v725 = vsub.s32 3, %v724
    %v726 = vrot.slane %v709, %v725
    %v987 = vunpack.c.l.b16 %v453
    %v988 = vunpack.c.h.b16 %v453
    %v989 = vunpack.c.l.b16 %v454
    %v990 = vunpack.c.h.b16 %v454
    %v991 = vunpack.c.l.b16 %v455
    %v992 = vunpack.c.h.b16 %v455
    %v993 = vunpack.c.l.b16 %v456
    %v994 = vunpack.c.h.b16 %v456
    %v995 = vunpack.c.l.b16 %v457
    %v996 = vunpack.c.h.b16 %v457
    %v997 = vunpack.c.l.b16 %v458
    %v998 = vunpack.c.h.b16 %v458
    %v999 = vunpack.c.l.b16 %v459
    %v1000 = vunpack.c.h.b16 %v459
    %v1001 = vunpack.c.l.b16 %v460
    %v1002 = vunpack.c.h.b16 %v460
    %v1003 = vunpack.c.l.b16 %v461
    %v1004 = vunpack.c.h.b16 %v461
    %v1005 = vunpack.c.l.b16 %v462
    %v1006 = vunpack.c.h.b16 %v462
    %v1007 = vunpack.c.l.b16 %v463
    %v1008 = vunpack.c.h.b16 %v463
    %v1009 = vunpack.c.l.b16 %v464
    %v1010 = vunpack.c.h.b16 %v464
    %v1011 = vunpack.c.l.b16 %v465
    %v1012 = vunpack.c.h.b16 %v465
    %v1013 = vunpack.c.l.b16 %v466
    %v1014 = vunpack.c.h.b16 %v466
    %v1015 = vunpack.c.l.b16 %v467
    %v1016 = vunpack.c.h.b16 %v467
    %v1017 = vunpack.c.l.b16 %v468
    %v1018 = vunpack.c.h.b16 %v468
    %v1019 = vunpack.c.l.b16 %v469
    %v1020 = vunpack.c.h.b16 %v469
    %v1021 = vunpack.c.l.b16 %v470
    %v1022 = vunpack.c.h.b16 %v470
    %v1023 = vunpack.c.l.b16 %v471
    %v1024 = vunpack.c.h.b16 %v471
    %v1025 = vunpack.c.l.b16 %v472
    %v1026 = vunpack.c.h.b16 %v472
    %v1027 = vunpack.c.l.b16 %v473
    %v1028 = vunpack.c.h.b16 %v473
    %v1029 = vunpack.c.l.b16 %v474
    %v1030 = vunpack.c.h.b16 %v474
    %v1031 = vunpack.c.l.b16 %v475
    %v1032 = vunpack.c.h.b16 %v475
    %v1033 = vunpack.c.l.b16 %v476
    %v1034 = vunpack.c.h.b16 %v476
    %v1035 = vunpack.c.l.b16 %v477
    %v1036 = vunpack.c.h.b16 %v477
    %v1037 = vunpack.c.l.b16 %v478
    %v1038 = vunpack.c.h.b16 %v478
    %v1039 = vunpack.c.l.b16 %v479
    %v1040 = vunpack.c.h.b16 %v479
    %v1041 = vunpack.c.l.b16 %v480
    %v1042 = vunpack.c.h.b16 %v480
    %v1043 = vunpack.c.l.b16 %v481
    %v1044 = vunpack.c.h.b16 %v481
    %v1045 = vunpack.c.l.b16 %v482
    %v1046 = vunpack.c.h.b16 %v482
    %v1047 = vunpack.c.l.b16 %v483
    %v1048 = vunpack.c.h.b16 %v483
    %v1049 = vunpack.c.l.b16 %v484
    %v1050 = vunpack.c.h.b16 %v484
    %v1051 = vunpack.c.l.b16 %v485
    %v1052 = vunpack.c.h.b16 %v485
    %v1053 = vunpack.c.l.b16 %v486
    %v1054 = vunpack.c.h.b16 %v486
    %v1055 = vunpack.c.l.b16 %v487
    %v1056 = vunpack.c.h.b16 %v487
    %v1057 = vunpack.c.l.b16 %v488
    %v1058 = vunpack.c.h.b16 %v488
    %v1059 = vunpack.c.l.b16 %v489
    %v1060 = vunpack.c.h.b16 %v489
    %v1061 = vunpack.c.l.b16 %v490
    %v1062 = vunpack.c.h.b16 %v490
    %v1063 = vunpack.c.l.b16 %v491
    %v1064 = vunpack.c.h.b16 %v491
    %v1065 = vunpack.c.l.b16 %v492
    %v1066 = vunpack.c.h.b16 %v492
    %v1067 = vunpack.c.l.b16 %v493
    %v1068 = vunpack.c.h.b16 %v493
    %v1069 = vunpack.c.l.b16 %v494
    %v1070 = vunpack.c.h.b16 %v494
    %v1071 = vunpack.c.l.b16 %v495
    %v1072 = vunpack.c.h.b16 %v495
    %v1073 = vunpack.c.l.b16 %v496
    %v1074 = vunpack.c.h.b16 %v496
    %v1075 = vunpack.c.l.b16 %v497
    %v1076 = vunpack.c.h.b16 %v497
    %v1077 = vunpack.c.l.b16 %v498
    %v1078 = vunpack.c.h.b16 %v498
    %v1079 = vunpack.c.l.b16 %v499
    %v1080 = vunpack.c.h.b16 %v499
    %v1081 = vunpack.c.l.b16 %v500
    %v1082 = vunpack.c.h.b16 %v500
    %v1083 = vunpack.c.l.b16 %v501
    %v1084 = vunpack.c.h.b16 %v501
    %v1085 = vunpack.c.l.b16 %v502
    %v1086 = vunpack.c.h.b16 %v502
    %v1087 = vunpack.c.l.b16 %v503
    %v1088 = vunpack.c.h.b16 %v503
    %v1089 = vunpack.c.l.b16 %v504
    %v1090 = vunpack.c.h.b16 %v504
    %v1091 = vunpack.c.l.b16 %v505
    %v1092 = vunpack.c.h.b16 %v505
    %v1093 = vunpack.c.l.b16 %v506
    %v1094 = vunpack.c.h.b16 %v506
    %v1095 = vunpack.c.l.b16 %v507
    %v1096 = vunpack.c.h.b16 %v507
    %v1097 = vunpack.c.l.b16 %v508
    %v1098 = vunpack.c.h.b16 %v508
    %v1099 = vunpack.c.l.b16 %v509
    %v1100 = vunpack.c.h.b16 %v509
    %v1101 = vunpack.c.l.b16 %v510
    %v1102 = vunpack.c.h.b16 %v510
    %v1103 = vunpack.c.l.b16 %v511
    %v1104 = vunpack.c.h.b16 %v511
    %v1105 = vunpack.c.l.b16 %v512
    %v1106 = vunpack.c.h.b16 %v512
    %v1107 = vunpack.c.l.b16 %v513
    %v1108 = vunpack.c.h.b16 %v513
    %v1109 = vunpack.c.l.b16 %v514
    %v1110 = vunpack.c.h.b16 %v514
    %v1111 = vunpack.c.l.b16 %v515
    %v1112 = vunpack.c.h.b16 %v515
    %v1113 = vunpack.c.l.b16 %v516
    %v1114 = vunpack.c.h.b16 %v516
    %v1115 = vunpack.c.l.b16 %v517
    %v1116 = vunpack.c.h.b16 %v517
    %v1117 = vunpack.c.l.b16 %v518
    %v1118 = vunpack.c.h.b16 %v518
    %v1119 = vunpack.c.l.b16 %v519
    %v1120 = vunpack.c.h.b16 %v519
    %v1121 = vunpack.c.l.b16 %v520
    %v1122 = vunpack.c.h.b16 %v520
    %v1123 = vunpack.c.l.b16 %v521
    %v1124 = vunpack.c.h.b16 %v521
    %v1125 = vunpack.c.l.b16 %v522
    %v1126 = vunpack.c.h.b16 %v522
    %v1127 = vunpack.c.l.b16 %v523
    %v1128 = vunpack.c.h.b16 %v523
    %v1129 = vunpack.c.l.b16 %v524
    %v1130 = vunpack.c.h.b16 %v524
    %v1131 = vunpack.c.l.b16 %v525
    %v1132 = vunpack.c.h.b16 %v525
    %v1133 = vunpack.c.l.b16 %v526
    %v1134 = vunpack.c.h.b16 %v526
    %v1135 = vunpack.c.l.b16 %v527
    %v1136 = vunpack.c.h.b16 %v527
    %v1137 = vunpack.c.l.b16 %v528
    %v1138 = vunpack.c.h.b16 %v528
    %v1139 = vunpack.c.l.b16 %v529
    %v1140 = vunpack.c.h.b16 %v529
    %v1141 = vunpack.c.l.b16 %v530
    %v1142 = vunpack.c.h.b16 %v530
    %v1143 = vunpack.c.l.b16 %v531
    %v1144 = vunpack.c.h.b16 %v531
    %v1145 = vunpack.c.l.b16 %v532
    %v1146 = vunpack.c.h.b16 %v532
    %v1147 = vunpack.c.l.b16 %v533
    %v1148 = vunpack.c.h.b16 %v533
    %v1149 = vunpack.c.l.b16 %v534
    %v1150 = vunpack.c.h.b16 %v534
    %v1151 = vunpack.c.l.b16 %v535
    %v1152 = vunpack.c.h.b16 %v535
    %v1153 = vunpack.c.l.b16 %v536
    %v1154 = vunpack.c.h.b16 %v536
    %v1155 = vunpack.c.l.b16 %v537
    %v1156 = vunpack.c.h.b16 %v537
    %v1157 = vunpack.c.l.b16 %v538
    %v1158 = vunpack.c.h.b16 %v538
    %v1159 = vunpack.c.l.b16 %v539
    %v1160 = vunpack.c.h.b16 %v539
    %v1161 = vunpack.c.l.b16 %v540
    %v1162 = vunpack.c.h.b16 %v540
    %v1163 = vunpack.c.l.b16 %v541
    %v1164 = vunpack.c.h.b16 %v541
    %v1165 = vunpack.c.l.b16 %v542
    %v1166 = vunpack.c.h.b16 %v542
    %v1167 = vunpack.c.l.b16 %v543
    %v1168 = vunpack.c.h.b16 %v543
    %v1169 = vunpack.c.l.b16 %v544
    %v1170 = vunpack.c.h.b16 %v544
    %v1171 = vunpack.c.l.b16 %v545
    %v1172 = vunpack.c.h.b16 %v545
    %v1173 = vunpack.c.l.b16 %v546
    %v1174 = vunpack.c.h.b16 %v546
    %v1175 = vunpack.c.l.b16 %v547
    %v1176 = vunpack.c.h.b16 %v547
    %v1177 = vunpack.c.l.b16 %v548
    %v1178 = vunpack.c.h.b16 %v548
    %v1179 = vunpack.c.l.b16 %v549
    %v1180 = vunpack.c.h.b16 %v549
    %v1181 = vunpack.c.l.b16 %v550
    %v1182 = vunpack.c.h.b16 %v550
    %v1183 = vunpack.c.l.b16 %v551
    %v1184 = vunpack.c.h.b16 %v551
    %v1185 = vunpack.c.l.b16 %v552
    %v1186 = vunpack.c.h.b16 %v552
    %v1187 = vunpack.c.l.b16 %v553
    %v1188 = vunpack.c.h.b16 %v553
    %v1189 = vunpack.c.l.b16 %v554
    %v1190 = vunpack.c.h.b16 %v554
    %v1191 = vunpack.c.l.b16 %v555
    %v1192 = vunpack.c.h.b16 %v555
    %v1193 = vunpack.c.l.b16 %v556
    %v1194 = vunpack.c.h.b16 %v556
    %v1195 = vunpack.c.l.b16 %v557
    %v1196 = vunpack.c.h.b16 %v557
    %v1197 = vunpack.c.l.b16 %v558
    %v1198 = vunpack.c.h.b16 %v558
    %v1199 = vunpack.c.l.b16 %v559
    %v1200 = vunpack.c.h.b16 %v559
    %v1201 = vunpack.c.l.b16 %v560
    %v1202 = vunpack.c.h.b16 %v560
    %v1203 = vunpack.c.l.b16 %v561
    %v1204 = vunpack.c.h.b16 %v561
    %v1205 = vunpack.c.l.b16 %v562
    %v1206 = vunpack.c.h.b16 %v562
    %v1207 = vunpack.c.l.b16 %v563
    %v1208 = vunpack.c.h.b16 %v563
    %v1209 = vunpack.c.l.b16 %v564
    %v1210 = vunpack.c.h.b16 %v564
    %v1211 = vunpack.c.l.b16 %v565
    %v1212 = vunpack.c.h.b16 %v565
    %v1213 = vunpack.c.l.b16 %v566
    %v1214 = vunpack.c.h.b16 %v566
    %v1215 = vunpack.c.l.b16 %v567
    %v1216 = vunpack.c.h.b16 %v567
    %v1217 = vunpack.c.l.b16 %v568
    %v1218 = vunpack.c.h.b16 %v568
    %v1219 = vunpack.c.l.b16 %v569
    %v1220 = vunpack.c.h.b16 %v569
    %v1221 = vunpack.c.l.b16 %v570
    %v1222 = vunpack.c.h.b16 %v570
    %v1223 = vunpack.c.l.b16 %v571
    %v1224 = vunpack.c.h.b16 %v571
    %v1225 = vunpack.c.l.b16 %v572
    %v1226 = vunpack.c.h.b16 %v572
    %v1227 = vunpack.c.l.b16 %v573
    %v1228 = vunpack.c.h.b16 %v573
    %v1229 = vunpack.c.l.b16 %v574
    %v1230 = vunpack.c.h.b16 %v574
    %v1231 = vunpack.c.l.b16 %v575
    %v1232 = vunpack.c.h.b16 %v575
    %v1233 = vunpack.c.l.b16 %v576
    %v1234 = vunpack.c.h.b16 %v576
    %v1235 = vunpack.c.l.b16 %v577
    %v1236 = vunpack.c.h.b16 %v577
    %v1237 = vunpack.c.l.b16 %v578
    %v1238 = vunpack.c.h.b16 %v578
    %v1239 = vunpack.c.l.b16 %v579
    %v1240 = vunpack.c.h.b16 %v579
    %v1241 = vunpack.c.l.b16 %v580
    %v1242 = vunpack.c.h.b16 %v580
    %v1243 = vunpack.c.l.b16 %v581
    %v1244 = vunpack.c.h.b16 %v581
    %v1245 = vunpack.c.l.b16 %v582
    %v1246 = vunpack.c.h.b16 %v582
    %v1247 = vunpack.c.l.b16 %v583
    %v1248 = vunpack.c.h.b16 %v583
    %v1249 = vunpack.c.l.b16 %v584
    %v1250 = vunpack.c.h.b16 %v584
    %v1251 = vunpack.c.l.b16 %v585
    %v1252 = vunpack.c.h.b16 %v585
    %v1253 = vunpack.c.l.b16 %v586
    %v1254 = vunpack.c.h.b16 %v586
    %v1255 = vunpack.c.l.b16 %v587
    %v1256 = vunpack.c.h.b16 %v587
    %v1257 = vunpack.c.l.b16 %v588
    %v1258 = vunpack.c.h.b16 %v588
    %v1259 = vunpack.c.l.b16 %v589
    %v1260 = vunpack.c.h.b16 %v589
    %v1261 = vunpack.c.l.b16 %v590
    %v1262 = vunpack.c.h.b16 %v590
    %v1263 = vunpack.c.l.b16 %v591
    %v1264 = vunpack.c.h.b16 %v591
    %v1265 = vunpack.c.l.b16 %v592
    %v1266 = vunpack.c.h.b16 %v592
    %v1267 = vunpack.c.l.b16 %v593
    %v1268 = vunpack.c.h.b16 %v593
    %v1269 = vunpack.c.l.b16 %v594
    %v1270 = vunpack.c.h.b16 %v594
    %v1271 = vunpack.c.l.b16 %v595
    %v1272 = vunpack.c.h.b16 %v595
    %v1273 = vunpack.c.l.b16 %v596
    %v1274 = vunpack.c.h.b16 %v596
    %v1275 = vunpack.c.l.b16 %v597
    %v1276 = vunpack.c.h.b16 %v597
    %v1277 = vunpack.c.l.b16 %v598
    %v1278 = vunpack.c.h.b16 %v598
    %v1279 = vunpack.c.l.b16 %v599
    %v1280 = vunpack.c.h.b16 %v599
    %v1281 = vunpack.c.l.b16 %v600
    %v1282 = vunpack.c.h.b16 %v600
    %v1283 = vunpack.c.l.b16 %v601
    %v1284 = vunpack.c.h.b16 %v601
    %v1285 = vunpack.c.l.b16 %v602
    %v1286 = vunpack.c.h.b16 %v602
    %v1287 = vunpack.c.l.b16 %v603
    %v1288 = vunpack.c.h.b16 %v603
    %v1289 = vunpack.c.l.b16 %v604
    %v1290 = vunpack.c.h.b16 %v604
    %v1291 = vunpack.c.l.b16 %v605
    %v1292 = vunpack.c.h.b16 %v605
    %v1293 = vunpack.c.l.b16 %v606
    %v1294 = vunpack.c.h.b16 %v606
    %v1295 = vunpack.c.l.b16 %v607
    %v1296 = vunpack.c.h.b16 %v607
    %v1297 = vunpack.c.l.b16 %v608
    %v1298 = vunpack.c.h.b16 %v608
    %v1299 = vunpack.c.l.b16 %v609
    %v1300 = vunpack.c.h.b16 %v609
    %v1301 = vunpack.c.l.b16 %v610
    %v1302 = vunpack.c.h.b16 %v610
    %v1303 = vunpack.c.l.b16 %v611
    %v1304 = vunpack.c.h.b16 %v611
    %v1305 = vunpack.c.l.b16 %v612
    %v1306 = vunpack.c.h.b16 %v612
    %v1307 = vunpack.c.l.b16 %v613
    %v1308 = vunpack.c.h.b16 %v613
    %v1309 = vunpack.c.l.b16 %v614
    %v1310 = vunpack.c.h.b16 %v614
    %v1311 = vunpack.c.l.b16 %v615
    %v1312 = vunpack.c.h.b16 %v615
    %v1313 = vunpack.c.l.b16 %v616
    %v1314 = vunpack.c.h.b16 %v616
    %v1315 = vunpack.c.l.b16 %v617
    %v1316 = vunpack.c.h.b16 %v617
    %v1317 = vunpack.c.l.b16 %v618
    %v1318 = vunpack.c.h.b16 %v618
    %v1319 = vunpack.c.l.b16 %v619
    %v1320 = vunpack.c.h.b16 %v619
    %v1321 = vunpack.c.l.b16 %v620
    %v1322 = vunpack.c.h.b16 %v620
    %v1323 = vunpack.c.l.b16 %v621
    %v1324 = vunpack.c.h.b16 %v621
    %v1325 = vunpack.c.l.b16 %v622
    %v1326 = vunpack.c.h.b16 %v622
    %v1327 = vunpack.c.l.b16 %v623
    %v1328 = vunpack.c.h.b16 %v623
    %v1329 = vunpack.c.l.b16 %v624
    %v1330 = vunpack.c.h.b16 %v624
    %v1331 = vunpack.c.l.b16 %v625
    %v1332 = vunpack.c.h.b16 %v625
    %v1333 = vunpack.c.l.b16 %v626
    %v1334 = vunpack.c.h.b16 %v626
    %v1335 = vunpack.c.l.b16 %v627
    %v1336 = vunpack.c.h.b16 %v627
    %v1337 = vunpack.c.l.b16 %v628
    %v1338 = vunpack.c.h.b16 %v628
    %v1339 = vunpack.c.l.b16 %v629
    %v1340 = vunpack.c.h.b16 %v629
    %v1341 = vunpack.c.l.b16 %v630
    %v1342 = vunpack.c.h.b16 %v630
    %v1343 = vunpack.c.l.b16 %v631
    %v1344 = vunpack.c.h.b16 %v631
    %v1345 = vunpack.c.l.b16 %v632
    %v1346 = vunpack.c.h.b16 %v632
    %v1347 = vunpack.c.l.b16 %v633
    %v1348 = vunpack.c.h.b16 %v633
    %v1349 = vunpack.c.l.b16 %v634
    %v1350 = vunpack.c.h.b16 %v634
    %v1351 = vunpack.c.l.b16 %v635
    %v1352 = vunpack.c.h.b16 %v635
    %v1353 = vunpack.c.l.b16 %v636
    %v1354 = vunpack.c.h.b16 %v636
    %v1355 = vunpack.c.l.b16 %v637
    %v1356 = vunpack.c.h.b16 %v637
    %v1357 = vunpack.c.l.b16 %v638
    %v1358 = vunpack.c.h.b16 %v638
    %v1359 = vunpack.c.l.b16 %v639
    %v1360 = vunpack.c.h.b16 %v639
    %v1361 = vunpack.c.l.b16 %v640
    %v1362 = vunpack.c.h.b16 %v640
    %v1363 = vunpack.c.l.b16 %v641
    %v1364 = vunpack.c.h.b16 %v641
    %v1365 = vunpack.c.l.b16 %v642
    %v1366 = vunpack.c.h.b16 %v642
    %v1367 = vunpack.c.l.b16 %v643
    %v1368 = vunpack.c.h.b16 %v643
    %v1369 = vunpack.c.l.b16 %v644
    %v1370 = vunpack.c.h.b16 %v644
    %v1371 = vunpack.c.l.b16 %v645
    %v1372 = vunpack.c.h.b16 %v645
    %v1373 = vunpack.c.l.b16 %v646
    %v1374 = vunpack.c.h.b16 %v646
    %v1375 = vunpack.c.l.b16 %v647
    %v1376 = vunpack.c.h.b16 %v647
    %v1377 = vunpack.c.l.b16 %v648
    %v1378 = vunpack.c.h.b16 %v648
    %v1379 = vunpack.c.l.b16 %v649
    %v1380 = vunpack.c.h.b16 %v649
    %v1381 = vunpack.c.l.b16 %v650
    %v1382 = vunpack.c.h.b16 %v650
    %v1383 = vunpack.c.l.b16 %v651
    %v1384 = vunpack.c.h.b16 %v651
    %v1385 = vunpack.c.l.b16 %v652
    %v1386 = vunpack.c.h.b16 %v652
    %v1387 = vunpack.c.l.b16 %v653
    %v1388 = vunpack.c.h.b16 %v653
    %v1389 = vunpack.c.l.b16 %v654
    %v1390 = vunpack.c.h.b16 %v654
    %v1391 = vunpack.c.l.b16 %v655
    %v1392 = vunpack.c.h.b16 %v655
    %v1393 = vunpack.c.l.b16 %v656
    %v1394 = vunpack.c.h.b16 %v656
    %v1395 = vunpack.c.l.b16 %v657
    %v1396 = vunpack.c.h.b16 %v657
    %v1397 = vunpack.c.l.b16 %v658
    %v1398 = vunpack.c.h.b16 %v658
    %v1399 = vunpack.c.l.b16 %v659
    %v1400 = vunpack.c.h.b16 %v659
    %v1401 = vunpack.c.l.b16 %v660
    %v1402 = vunpack.c.h.b16 %v660
    %v1403 = vunpack.c.l.b16 %v661
    %v1404 = vunpack.c.h.b16 %v661
    %v1405 = vunpack.c.l.b16 %v662
    %v1406 = vunpack.c.h.b16 %v662
    %v1407 = vunpack.c.l.b16 %v663
    %v1408 = vunpack.c.h.b16 %v663
    %v1409 = vunpack.c.l.b16 %v664
    %v1410 = vunpack.c.h.b16 %v664
    %v1411 = vunpack.c.l.b16 %v665
    %v1412 = vunpack.c.h.b16 %v665
    %v1413 = vunpack.c.l.b16 %v666
    %v1414 = vunpack.c.h.b16 %v666
    %v1415 = vunpack.c.l.b16 %v667
    %v1416 = vunpack.c.h.b16 %v667
    %v1417 = vunpack.c.l.b16 %v668
    %v1418 = vunpack.c.h.b16 %v668
    %v1419 = vunpack.c.l.b16 %v669
    %v1420 = vunpack.c.h.b16 %v669
    %v1421 = vunpack.c.l.b16 %v670
    %v1422 = vunpack.c.h.b16 %v670
    %v1423 = vunpack.c.l.b16 %v671
    %v1424 = vunpack.c.h.b16 %v671
    %v1425 = vunpack.c.l.b16 %v672
    %v1426 = vunpack.c.h.b16 %v672
    %v1427 = vunpack.c.l.b16 %v673
    %v1428 = vunpack.c.h.b16 %v673
    %v1429 = vunpack.c.l.b16 %v674
    %v1430 = vunpack.c.h.b16 %v674
    %v1431 = vunpack.c.l.b16 %v675
    %v1432 = vunpack.c.h.b16 %v675
    %v1433 = vunpack.c.l.b16 %v676
    %v1434 = vunpack.c.h.b16 %v676
    %v1435 = vunpack.c.l.b16 %v677
    %v1436 = vunpack.c.h.b16 %v677
    %v1437 = vunpack.c.l.b16 %v678
    %v1438 = vunpack.c.h.b16 %v678
    %v1439 = vunpack.c.l.b16 %v679
    %v1440 = vunpack.c.h.b16 %v679
    %v1441 = vunpack.c.l.b16 %v680
    %v1442 = vunpack.c.h.b16 %v680
    %v1443 = vunpack.c.l.b16 %v681
    %v1444 = vunpack.c.h.b16 %v681
    %v1445 = vunpack.c.l.b16 %v682
    %v1446 = vunpack.c.h.b16 %v682
    %v1447 = vunpack.c.l.b16 %v683
    %v1448 = vunpack.c.h.b16 %v683
    %v1449 = vunpack.c.l.b16 %v684
    %v1450 = vunpack.c.h.b16 %v684
    %v1451 = vunpack.c.l.b16 %v685
    %v1452 = vunpack.c.h.b16 %v685
    %v1453 = vunpack.c.l.b16 %v686
    %v1454 = vunpack.c.h.b16 %v686
    %v1455 = vunpack.c.l.b16 %v687
    %v1456 = vunpack.c.h.b16 %v687
    %v1457 = vunpack.c.l.b16 %v688
    %v1458 = vunpack.c.h.b16 %v688
    %v1459 = vunpack.c.l.b16 %v689
    %v1460 = vunpack.c.h.b16 %v689
    %v1461 = vunpack.c.l.b16 %v690
    %v1462 = vunpack.c.h.b16 %v690
    %v1463 = vunpack.c.l.b16 %v691
    %v1464 = vunpack.c.h.b16 %v691
    %v1465 = vunpack.c.l.b16 %v692
    %v1466 = vunpack.c.h.b16 %v692
    %v1467 = vunpack.c.l.b16 %v693
    %v1468 = vunpack.c.h.b16 %v693
    %v1469 = vunpack.c.l.b16 %v694
    %v1470 = vunpack.c.h.b16 %v694
    %v1471 = vunpack.c.l.b16 %v695
    %v1472 = vunpack.c.h.b16 %v695
    %v1473 = vunpack.c.l.b16 %v696
    %v1474 = vunpack.c.h.b16 %v696
    %v1475 = vunpack.c.l.b16 %v697
    %v1476 = vunpack.c.h.b16 %v697
    %v1477 = vunpack.c.l.b16 %v698
    %v1478 = vunpack.c.h.b16 %v698
    %v1479 = vunpack.c.l.b16 %v699
    %v1480 = vunpack.c.h.b16 %v699
    %v1481 = vunpack.c.l.b16 %v700
    %v1482 = vunpack.c.h.b16 %v700
    %v1483 = vunpack.c.l.b16 %v701
    %v1484 = vunpack.c.h.b16 %v701
    %v1485 = vunpack.c.l.b16 %v702
    %v1486 = vunpack.c.h.b16 %v702
    %v1487 = vunpack.c.l.b16 %v703
    %v1488 = vunpack.c.h.b16 %v703
    %v1489 = vunpack.c.l.b16 %v704
    %v1490 = vunpack.c.h.b16 %v704
    %v1491 = vunpack.c.l.b16 %v705
    %v1492 = vunpack.c.h.b16 %v705
    %v1493 = vunpack.c.l.b16 %v706
    %v1494 = vunpack.c.h.b16 %v706
    %v1495 = vunpack.c.l.b16 %v707
    %v1496 = vunpack.c.h.b16 %v707
    %v1497 = vunpack.c.l.b16 %v708
    %v1498 = vunpack.c.h.b16 %v708
    %v1499 = vpack.c.b16 %v991, %v987
    %v1500 = vpack.c.b16 %v992, %v988
    %v1501 = vpack.c.b16 %v993, %v989
    %v1502 = vpack.c.b16 %v994, %v990
    %v1503 = vpack.c.b16 %v999, %v995
    %v1504 = vpack.c.b16 %v1000, %v996
    %v1505 = vpack.c.b16 %v1001, %v997
    %v1506 = vpack.c.b16 %v1002, %v998
    %v1507 = vpack.c.b16 %v1007, %v1003
    %v1508 = vpack.c.b16 %v1008, %v1004
    %v1509 = vpack.c.b16 %v1009, %v1005
    %v1510 = vpack.c.b16 %v1010, %v1006
    %v1511 = vpack.c.b16 %v1015, %v1011
    %v1512 = vpack.c.b16 %v1016, %v1012
    %v1513 = vpack.c.b16 %v1017, %v1013
    %v1514 = vpack.c.b16 %v1018, %v1014
    %v1515 = vpack.c.b16 %v1023, %v1019
    %v1516 = vpack.c.b16 %v1024, %v1020
    %v1517 = vpack.c.b16 %v1025, %v1021
    %v1518 = vpack.c.b16 %v1026, %v1022
    %v1519 = vpack.c.b16 %v1031, %v1027
    %v1520 = vpack.c.b16 %v1032, %v1028
    %v1521 = vpack.c.b16 %v1033, %v1029
    %v1522 = vpack.c.b16 %v1034, %v1030
    %v1523 = vpack.c.b16 %v1039, %v1035
    %v1524 = vpack.c.b16 %v1040, %v1036
    %v1525 = vpack.c.b16 %v1041, %v1037
    %v1526 = vpack.c.b16 %v1042, %v1038
    %v1527 = vpack.c.b16 %v1047, %v1043
    %v1528 = vpack.c.b16 %v1048, %v1044
    %v1529 = vpack.c.b16 %v1049, %v1045
    %v1530 = vpack.c.b16 %v1050, %v1046
    %v1531 = vpack.c.b16 %v1055, %v1051
    %v1532 = vpack.c.b16 %v1056, %v1052
    %v1533 = vpack.c.b16 %v1057, %v1053
    %v1534 = vpack.c.b16 %v1058, %v1054
    %v1535 = vpack.c.b16 %v1063, %v1059
    %v1536 = vpack.c.b16 %v1064, %v1060
    %v1537 = vpack.c.b16 %v1065, %v1061
    %v1538 = vpack.c.b16 %v1066, %v1062
    %v1539 = vpack.c.b16 %v1071, %v1067
    %v1540 = vpack.c.b16 %v1072, %v1068
    %v1541 = vpack.c.b16 %v1073, %v1069
    %v1542 = vpack.c.b16 %v1074, %v1070
    %v1543 = vpack.c.b16 %v1079, %v1075
    %v1544 = vpack.c.b16 %v1080, %v1076
    %v1545 = vpack.c.b16 %v1081, %v1077
    %v1546 = vpack.c.b16 %v1082, %v1078
    %v1547 = vpack.c.b16 %v1087, %v1083
    %v1548 = vpack.c.b16 %v1088, %v1084
    %v1549 = vpack.c.b16 %v1089, %v1085
    %v1550 = vpack.c.b16 %v1090, %v1086
    %v1551 = vpack.c.b16 %v1095, %v1091
    %v1552 = vpack.c.b16 %v1096, %v1092
    %v1553 = vpack.c.b16 %v1097, %v1093
    %v1554 = vpack.c.b16 %v1098, %v1094
    %v1555 = vpack.c.b16 %v1103, %v1099
    %v1556 = vpack.c.b16 %v1104, %v1100
    %v1557 = vpack.c.b16 %v1105, %v1101
    %v1558 = vpack.c.b16 %v1106, %v1102
    %v1559 = vpack.c.b16 %v1111, %v1107
    %v1560 = vpack.c.b16 %v1112, %v1108
    %v1561 = vpack.c.b16 %v1113, %v1109
    %v1562 = vpack.c.b16 %v1114, %v1110
    %v1563 = vpack.c.b16 %v1119, %v1115
    %v1564 = vpack.c.b16 %v1120, %v1116
    %v1565 = vpack.c.b16 %v1121, %v1117
    %v1566 = vpack.c.b16 %v1122, %v1118
    %v1567 = vpack.c.b16 %v1127, %v1123
    %v1568 = vpack.c.b16 %v1128, %v1124
    %v1569 = vpack.c.b16 %v1129, %v1125
    %v1570 = vpack.c.b16 %v1130, %v1126
    %v1571 = vpack.c.b16 %v1135, %v1131
    %v1572 = vpack.c.b16 %v1136, %v1132
    %v1573 = vpack.c.b16 %v1137, %v1133
    %v1574 = vpack.c.b16 %v1138, %v1134
    %v1575 = vpack.c.b16 %v1143, %v1139
    %v1576 = vpack.c.b16 %v1144, %v1140
    %v1577 = vpack.c.b16 %v1145, %v1141
    %v1578 = vpack.c.b16 %v1146, %v1142
    %v1579 = vpack.c.b16 %v1151, %v1147
    %v1580 = vpack.c.b16 %v1152, %v1148
    %v1581 = vpack.c.b16 %v1153, %v1149
    %v1582 = vpack.c.b16 %v1154, %v1150
    %v1583 = vpack.c.b16 %v1159, %v1155
    %v1584 = vpack.c.b16 %v1160, %v1156
    %v1585 = vpack.c.b16 %v1161, %v1157
    %v1586 = vpack.c.b16 %v1162, %v1158
    %v1587 = vpack.c.b16 %v1167, %v1163
    %v1588 = vpack.c.b16 %v1168, %v1164
    %v1589 = vpack.c.b16 %v1169, %v1165
    %v1590 = vpack.c.b16 %v1170, %v1166
    %v1591 = vpack.c.b16 %v1175, %v1171
    %v1592 = vpack.c.b16 %v1176, %v1172
    %v1593 = vpack.c.b16 %v1177, %v1173
    %v1594 = vpack.c.b16 %v1178, %v1174
    %v1595 = vpack.c.b16 %v1183, %v1179
    %v1596 = vpack.c.b16 %v1184, %v1180
    %v1597 = vpack.c.b16 %v1185, %v1181
    %v1598 = vpack.c.b16 %v1186, %v1182
    %v1599 = vpack.c.b16 %v1191, %v1187
    %v1600 = vpack.c.b16 %v1192, %v1188
    %v1601 = vpack.c.b16 %v1193, %v1189
    %v1602 = vpack.c.b16 %v1194, %v1190
    %v1603 = vpack.c.b16 %v1199, %v1195
    %v1604 = vpack.c.b16 %v1200, %v1196
    %v1605 = vpack.c.b16 %v1201, %v1197
    %v1606 = vpack.c.b16 %v1202, %v1198
    %v1607 = vpack.c.b16 %v1207, %v1203
    %v1608 = vpack.c.b16 %v1208, %v1204
    %v1609 = vpack.c.b16 %v1209, %v1205
    %v1610 = vpack.c.b16 %v1210, %v1206
    %v1611 = vpack.c.b16 %v1215, %v1211
    %v1612 = vpack.c.b16 %v1216, %v1212
    %v1613 = vpack.c.b16 %v1217, %v1213
    %v1614 = vpack.c.b16 %v1218, %v1214
    %v1615 = vpack.c.b16 %v1223, %v1219
    %v1616 = vpack.c.b16 %v1224, %v1220
    %v1617 = vpack.c.b16 %v1225, %v1221
    %v1618 = vpack.c.b16 %v1226, %v1222
    %v1619 = vpack.c.b16 %v1231, %v1227
    %v1620 = vpack.c.b16 %v1232, %v1228
    %v1621 = vpack.c.b16 %v1233, %v1229
    %v1622 = vpack.c.b16 %v1234, %v1230
    %v1623 = vpack.c.b16 %v1239, %v1235
    %v1624 = vpack.c.b16 %v1240, %v1236
    %v1625 = vpack.c.b16 %v1241, %v1237
    %v1626 = vpack.c.b16 %v1242, %v1238
    %v1627 = vpack.c.b16 %v1247, %v1243
    %v1628 = vpack.c.b16 %v1248, %v1244
    %v1629 = vpack.c.b16 %v1249, %v1245
    %v1630 = vpack.c.b16 %v1250, %v1246
    %v1631 = vpack.c.b16 %v1255, %v1251
    %v1632 = vpack.c.b16 %v1256, %v1252
    %v1633 = vpack.c.b16 %v1257, %v1253
    %v1634 = vpack.c.b16 %v1258, %v1254
    %v1635 = vpack.c.b16 %v1263, %v1259
    %v1636 = vpack.c.b16 %v1264, %v1260
    %v1637 = vpack.c.b16 %v1265, %v1261
    %v1638 = vpack.c.b16 %v1266, %v1262
    %v1639 = vpack.c.b16 %v1271, %v1267
    %v1640 = vpack.c.b16 %v1272, %v1268
    %v1641 = vpack.c.b16 %v1273, %v1269
    %v1642 = vpack.c.b16 %v1274, %v1270
    %v1643 = vpack.c.b16 %v1279, %v1275
    %v1644 = vpack.c.b16 %v1280, %v1276
    %v1645 = vpack.c.b16 %v1281, %v1277
    %v1646 = vpack.c.b16 %v1282, %v1278
    %v1647 = vpack.c.b16 %v1287, %v1283
    %v1648 = vpack.c.b16 %v1288, %v1284
    %v1649 = vpack.c.b16 %v1289, %v1285
    %v1650 = vpack.c.b16 %v1290, %v1286
    %v1651 = vpack.c.b16 %v1295, %v1291
    %v1652 = vpack.c.b16 %v1296, %v1292
    %v1653 = vpack.c.b16 %v1297, %v1293
    %v1654 = vpack.c.b16 %v1298, %v1294
    %v1655 = vpack.c.b16 %v1303, %v1299
    %v1656 = vpack.c.b16 %v1304, %v1300
    %v1657 = vpack.c.b16 %v1305, %v1301
    %v1658 = vpack.c.b16 %v1306, %v1302
    %v1659 = vpack.c.b16 %v1311, %v1307
    %v1660 = vpack.c.b16 %v1312, %v1308
    %v1661 = vpack.c.b16 %v1313, %v1309
    %v1662 = vpack.c.b16 %v1314, %v1310
    %v1663 = vpack.c.b16 %v1319, %v1315
    %v1664 = vpack.c.b16 %v1320, %v1316
    %v1665 = vpack.c.b16 %v1321, %v1317
    %v1666 = vpack.c.b16 %v1322, %v1318
    %v1667 = vpack.c.b16 %v1327, %v1323
    %v1668 = vpack.c.b16 %v1328, %v1324
    %v1669 = vpack.c.b16 %v1329, %v1325
    %v1670 = vpack.c.b16 %v1330, %v1326
    %v1671 = vpack.c.b16 %v1335, %v1331
    %v1672 = vpack.c.b16 %v1336, %v1332
    %v1673 = vpack.c.b16 %v1337, %v1333
    %v1674 = vpack.c.b16 %v1338, %v1334
    %v1675 = vpack.c.b16 %v1343, %v1339
    %v1676 = vpack.c.b16 %v1344, %v1340
    %v1677 = vpack.c.b16 %v1345, %v1341
    %v1678 = vpack.c.b16 %v1346, %v1342
    %v1679 = vpack.c.b16 %v1351, %v1347
    %v1680 = vpack.c.b16 %v1352, %v1348
    %v1681 = vpack.c.b16 %v1353, %v1349
    %v1682 = vpack.c.b16 %v1354, %v1350
    %v1683 = vpack.c.b16 %v1359, %v1355
    %v1684 = vpack.c.b16 %v1360, %v1356
    %v1685 = vpack.c.b16 %v1361, %v1357
    %v1686 = vpack.c.b16 %v1362, %v1358
    %v1687 = vpack.c.b16 %v1367, %v1363
    %v1688 = vpack.c.b16 %v1368, %v1364
    %v1689 = vpack.c.b16 %v1369, %v1365
    %v1690 = vpack.c.b16 %v1370, %v1366
    %v1691 = vpack.c.b16 %v1375, %v1371
    %v1692 = vpack.c.b16 %v1376, %v1372
    %v1693 = vpack.c.b16 %v1377, %v1373
    %v1694 = vpack.c.b16 %v1378, %v1374
    %v1695 = vpack.c.b16 %v1383, %v1379
    %v1696 = vpack.c.b16 %v1384, %v1380
    %v1697 = vpack.c.b16 %v1385, %v1381
    %v1698 = vpack.c.b16 %v1386, %v1382
    %v1699 = vpack.c.b16 %v1391, %v1387
    %v1700 = vpack.c.b16 %v1392, %v1388
    %v1701 = vpack.c.b16 %v1393, %v1389
    %v1702 = vpack.c.b16 %v1394, %v1390
    %v1703 = vpack.c.b16 %v1399, %v1395
    %v1704 = vpack.c.b16 %v1400, %v1396
    %v1705 = vpack.c.b16 %v1401, %v1397
    %v1706 = vpack.c.b16 %v1402, %v1398
    %v1707 = vpack.c.b16 %v1407, %v1403
    %v1708 = vpack.c.b16 %v1408, %v1404
    %v1709 = vpack.c.b16 %v1409, %v1405
    %v1710 = vpack.c.b16 %v1410, %v1406
    %v1711 = vpack.c.b16 %v1415, %v1411
    %v1712 = vpack.c.b16 %v1416, %v1412
    %v1713 = vpack.c.b16 %v1417, %v1413
    %v1714 = vpack.c.b16 %v1418, %v1414
    %v1715 = vpack.c.b16 %v1423, %v1419
    %v1716 = vpack.c.b16 %v1424, %v1420
    %v1717 = vpack.c.b16 %v1425, %v1421
    %v1718 = vpack.c.b16 %v1426, %v1422
    %v1719 = vpack.c.b16 %v1431, %v1427
    %v1720 = vpack.c.b16 %v1432, %v1428
    %v1721 = vpack.c.b16 %v1433, %v1429
    %v1722 = vpack.c.b16 %v1434, %v1430
    %v1723 = vpack.c.b16 %v1439, %v1435
    %v1724 = vpack.c.b16 %v1440, %v1436
    %v1725 = vpack.c.b16 %v1441, %v1437
    %v1726 = vpack.c.b16 %v1442, %v1438
    %v1727 = vpack.c.b16 %v1447, %v1443
    %v1728 = vpack.c.b16 %v1448, %v1444
    %v1729 = vpack.c.b16 %v1449, %v1445
    %v1730 = vpack.c.b16 %v1450, %v1446
    %v1731 = vpack.c.b16 %v1455, %v1451
    %v1732 = vpack.c.b16 %v1456, %v1452
    %v1733 = vpack.c.b16 %v1457, %v1453
    %v1734 = vpack.c.b16 %v1458, %v1454
    %v1735 = vpack.c.b16 %v1463, %v1459
    %v1736 = vpack.c.b16 %v1464, %v1460
    %v1737 = vpack.c.b16 %v1465, %v1461
    %v1738 = vpack.c.b16 %v1466, %v1462
    %v1739 = vpack.c.b16 %v1471, %v1467
    %v1740 = vpack.c.b16 %v1472, %v1468
    %v1741 = vpack.c.b16 %v1473, %v1469
    %v1742 = vpack.c.b16 %v1474, %v1470
    %v1743 = vpack.c.b16 %v1479, %v1475
    %v1744 = vpack.c.b16 %v1480, %v1476
    %v1745 = vpack.c.b16 %v1481, %v1477
    %v1746 = vpack.c.b16 %v1482, %v1478
    %v1747 = vpack.c.b16 %v1487, %v1483
    %v1748 = vpack.c.b16 %v1488, %v1484
    %v1749 = vpack.c.b16 %v1489, %v1485
    %v1750 = vpack.c.b16 %v1490, %v1486
    %v1751 = vpack.c.b16 %v1495, %v1491
    %v1752 = vpack.c.b16 %v1496, %v1492
    %v1753 = vpack.c.b16 %v1497, %v1493
    %v1754 = vpack.c.b16 %v1498, %v1494
    %2011 = vmatprep.subr.bf16.mxu0 %v1528
    %2012 = vmatpush1.bf16.msra.mxu0 %v1527
    %2013 = vmatprep.subr.bf16.mxu0 %v1524
    %2014 = vmatpush1.bf16.msra.mxu0 %v1523
    %2015 = vmatprep.subr.bf16.mxu0 %v1520
    %2016 = vmatpush1.bf16.msra.mxu0 %v1519
    %2017 = vmatprep.subr.bf16.mxu0 %v1516
    %2018 = vmatpush1.bf16.msra.mxu0 %v1515
    %2019 = vmatprep.subr.bf16.mxu0 %v1512
    %2020 = vmatpush1.bf16.msra.mxu0 %v1511
    %2021 = vmatprep.subr.bf16.mxu0 %v1508
    %2022 = vmatpush1.bf16.msra.mxu0 %v1507
    %2023 = vmatprep.subr.bf16.mxu0 %v1504
    %2024 = vmatpush1.bf16.msra.mxu0 %v1503
    %2025 = vmatprep.subr.bf16.mxu0 %v1500
    %2026 = vmatpush1.bf16.msra.mxu0 %v1499
    %2027 = vmatprep.subr.bf16.mxu0 %v1560
    %2028 = vmatpush2.bf16.msra.mxu0 %v1559
    %2029 = vmatprep.subr.bf16.mxu0 %v1556
    %2030 = vmatpush2.bf16.msra.mxu0 %v1555
    %2031 = vmatprep.subr.bf16.mxu0 %v1552
    %2032 = vmatpush2.bf16.msra.mxu0 %v1551
    %2033 = vmatprep.subr.bf16.mxu0 %v1548
    %2034 = vmatpush2.bf16.msra.mxu0 %v1547
    %2035 = vmatprep.subr.bf16.mxu0 %v1544
    %2036 = vmatpush2.bf16.msra.mxu0 %v1543
    %2037 = vmatprep.subr.bf16.mxu0 %v1540
    %2038 = vmatpush2.bf16.msra.mxu0 %v1539
    %2039 = vmatprep.subr.bf16.mxu0 %v1536
    %2040 = vmatpush2.bf16.msra.mxu0 %v1535
    %2041 = vmatprep.subr.bf16.mxu0 %v1532
    %2042 = vmatpush2.bf16.msra.mxu0 %v1531
    %2043 = vmatprep.mubr.bf16.mxu0 %v446
    %2044 = vmatmul.mubr.bf16.gmra.mxu0 %v445
    %v2045 = vpop.f32.mrf.mxu0
    %v2046 = vadd.f32 %v714, %v2045
    %v2047 = vpop.f32.mrf.mxu0
    %v2048 = vadd.f32 %v718, %v2047
    %v2049 = vpop.f32.mrf.mxu0
    %v2050 = vadd.f32 %v714, %v2049
    %v2051 = vpop.f32.mrf.mxu0
    %v2052 = vadd.f32 %v718, %v2051
    %2053 = vdwg.mxu0
    %2054 = vmatprep.subr.bf16.mxu0 %v1592
    %2055 = vmatpush1.bf16.msra.mxu0 %v1591
    %2056 = vmatprep.subr.bf16.mxu0 %v1588
    %2057 = vmatpush1.bf16.msra.mxu0 %v1587
    %2058 = vmatprep.subr.bf16.mxu0 %v1584
    %2059 = vmatpush1.bf16.msra.mxu0 %v1583
    %2060 = vmatprep.subr.bf16.mxu0 %v1580
    %2061 = vmatpush1.bf16.msra.mxu0 %v1579
    %2062 = vmatprep.subr.bf16.mxu0 %v1576
    %2063 = vmatpush1.bf16.msra.mxu0 %v1575
    %2064 = vmatprep.subr.bf16.mxu0 %v1572
    %2065 = vmatpush1.bf16.msra.mxu0 %v1571
    %2066 = vmatprep.subr.bf16.mxu0 %v1568
    %2067 = vmatpush1.bf16.msra.mxu0 %v1567
    %2068 = vmatprep.subr.bf16.mxu0 %v1564
    %2069 = vmatpush1.bf16.msra.mxu0 %v1563
    %2070 = vmatprep.subr.bf16.mxu0 %v1624
    %2071 = vmatpush2.bf16.msra.mxu0 %v1623
    %2072 = vmatprep.subr.bf16.mxu0 %v1620
    %2073 = vmatpush2.bf16.msra.mxu0 %v1619
    %2074 = vmatprep.subr.bf16.mxu0 %v1616
    %2075 = vmatpush2.bf16.msra.mxu0 %v1615
    %2076 = vmatprep.subr.bf16.mxu0 %v1612
    %2077 = vmatpush2.bf16.msra.mxu0 %v1611
    %2078 = vmatprep.subr.bf16.mxu0 %v1608
    %2079 = vmatpush2.bf16.msra.mxu0 %v1607
    %2080 = vmatprep.subr.bf16.mxu0 %v1604
    %2081 = vmatpush2.bf16.msra.mxu0 %v1603
    %2082 = vmatprep.subr.bf16.mxu0 %v1600
    %2083 = vmatpush2.bf16.msra.mxu0 %v1599
    %2084 = vmatprep.subr.bf16.mxu0 %v1596
    %2085 = vmatpush2.bf16.msra.mxu0 %v1595
    %2086 = vmatprep.mubr.bf16.mxu0 %v448
    %2087 = vmatmul.mubr.bf16.gmra.mxu0 %v447
    %v2088 = vpop.f32.mrf.mxu0
    %v2089 = vadd.f32 %v2046, %v2088
    %v2090 = vpop.f32.mrf.mxu0
    %v2091 = vadd.f32 %v2048, %v2090
    %v2092 = vpop.f32.mrf.mxu0
    %v2093 = vadd.f32 %v2050, %v2092
    %v2094 = vpop.f32.mrf.mxu0
    %v2095 = vadd.f32 %v2052, %v2094
    %2096 = vdwg.mxu0
    %2097 = vmatprep.subr.bf16.mxu0 %v1656
    %2098 = vmatpush1.bf16.msra.mxu0 %v1655
    %2099 = vmatprep.subr.bf16.mxu0 %v1652
    %2100 = vmatpush1.bf16.msra.mxu0 %v1651
    %2101 = vmatprep.subr.bf16.mxu0 %v1648
    %2102 = vmatpush1.bf16.msra.mxu0 %v1647
    %2103 = vmatprep.subr.bf16.mxu0 %v1644
    %2104 = vmatpush1.bf16.msra.mxu0 %v1643
    %2105 = vmatprep.subr.bf16.mxu0 %v1640
    %2106 = vmatpush1.bf16.msra.mxu0 %v1639
    %2107 = vmatprep.subr.bf16.mxu0 %v1636
    %2108 = vmatpush1.bf16.msra.mxu0 %v1635
    %2109 = vmatprep.subr.bf16.mxu0 %v1632
    %2110 = vmatpush1.bf16.msra.mxu0 %v1631
    %2111 = vmatprep.subr.bf16.mxu0 %v1628
    %2112 = vmatpush1.bf16.msra.mxu0 %v1627
    %2113 = vmatprep.subr.bf16.mxu0 %v1688
    %2114 = vmatpush2.bf16.msra.mxu0 %v1687
    %2115 = vmatprep.subr.bf16.mxu0 %v1684
    %2116 = vmatpush2.bf16.msra.mxu0 %v1683
    %2117 = vmatprep.subr.bf16.mxu0 %v1680
    %2118 = vmatpush2.bf16.msra.mxu0 %v1679
    %2119 = vmatprep.subr.bf16.mxu0 %v1676
    %2120 = vmatpush2.bf16.msra.mxu0 %v1675
    %2121 = vmatprep.subr.bf16.mxu0 %v1672
    %2122 = vmatpush2.bf16.msra.mxu0 %v1671
    %2123 = vmatprep.subr.bf16.mxu0 %v1668
    %2124 = vmatpush2.bf16.msra.mxu0 %v1667
    %2125 = vmatprep.subr.bf16.mxu0 %v1664
    %2126 = vmatpush2.bf16.msra.mxu0 %v1663
    %2127 = vmatprep.subr.bf16.mxu0 %v1660
    %2128 = vmatpush2.bf16.msra.mxu0 %v1659
    %2129 = vmatprep.mubr.bf16.mxu0 %v450
    %2130 = vmatmul.mubr.bf16.gmra.mxu0 %v449
    %v2131 = vpop.f32.mrf.mxu0
    %v2132 = vadd.f32 %v2089, %v2131
    %v2133 = vpop.f32.mrf.mxu0
    %v2134 = vadd.f32 %v2091, %v2133
    %v2135 = vpop.f32.mrf.mxu0
    %v2136 = vadd.f32 %v2093, %v2135
    %v2137 = vpop.f32.mrf.mxu0
    %v2138 = vadd.f32 %v2095, %v2137
    %2139 = vdwg.mxu0
    %2140 = vmatprep.subr.bf16.mxu0 %v1720
    %2141 = vmatpush1.bf16.msra.mxu0 %v1719
    %2142 = vmatprep.subr.bf16.mxu0 %v1716
    %2143 = vmatpush1.bf16.msra.mxu0 %v1715
    %2144 = vmatprep.subr.bf16.mxu0 %v1712
    %2145 = vmatpush1.bf16.msra.mxu0 %v1711
    %2146 = vmatprep.subr.bf16.mxu0 %v1708
    %2147 = vmatpush1.bf16.msra.mxu0 %v1707
    %2148 = vmatprep.subr.bf16.mxu0 %v1704
    %2149 = vmatpush1.bf16.msra.mxu0 %v1703
    %2150 = vmatprep.subr.bf16.mxu0 %v1700
    %2151 = vmatpush1.bf16.msra.mxu0 %v1699
    %2152 = vmatprep.subr.bf16.mxu0 %v1696
    %2153 = vmatpush1.bf16.msra.mxu0 %v1695
    %2154 = vmatprep.subr.bf16.mxu0 %v1692
    %2155 = vmatpush1.bf16.msra.mxu0 %v1691
    %2156 = vmatprep.subr.bf16.mxu0 %v1752
    %2157 = vmatpush2.bf16.msra.mxu0 %v1751
    %2158 = vmatprep.subr.bf16.mxu0 %v1748
    %2159 = vmatpush2.bf16.msra.mxu0 %v1747
    %2160 = vmatprep.subr.bf16.mxu0 %v1744
    %2161 = vmatpush2.bf16.msra.mxu0 %v1743
    %2162 = vmatprep.subr.bf16.mxu0 %v1740
    %2163 = vmatpush2.bf16.msra.mxu0 %v1739
    %2164 = vmatprep.subr.bf16.mxu0 %v1736
    %2165 = vmatpush2.bf16.msra.mxu0 %v1735
    %2166 = vmatprep.subr.bf16.mxu0 %v1732
    %2167 = vmatpush2.bf16.msra.mxu0 %v1731
    %2168 = vmatprep.subr.bf16.mxu0 %v1728
    %2169 = vmatpush2.bf16.msra.mxu0 %v1727
    %2170 = vmatprep.subr.bf16.mxu0 %v1724
    %2171 = vmatpush2.bf16.msra.mxu0 %v1723
    %2172 = vmatprep.mubr.bf16.mxu0 %v452
    %2173 = vmatmul.mubr.bf16.gmra.mxu0 %v451
    %v2174 = vpop.f32.mrf.mxu0
    %v2175 = vadd.f32 %v2132, %v2174
    %v2176 = vpop.f32.mrf.mxu0
    %v2177 = vadd.f32 %v2134, %v2176
    %v2178 = vpop.f32.mrf.mxu0
    %v2179 = vadd.f32 %v2136, %v2178
    %v2180 = vpop.f32.mrf.mxu0
    %v2181 = vadd.f32 %v2138, %v2180
    %2182 = vdwg.mxu0
    %2183 = vmatprep.subr.bf16.mxu0 %v1530
    %2184 = vmatpush1.bf16.msra.mxu0 %v1529
    %2185 = vmatprep.subr.bf16.mxu0 %v1526
    %2186 = vmatpush1.bf16.msra.mxu0 %v1525
    %2187 = vmatprep.subr.bf16.mxu0 %v1522
    %2188 = vmatpush1.bf16.msra.mxu0 %v1521
    %2189 = vmatprep.subr.bf16.mxu0 %v1518
    %2190 = vmatpush1.bf16.msra.mxu0 %v1517
    %2191 = vmatprep.subr.bf16.mxu0 %v1514
    %2192 = vmatpush1.bf16.msra.mxu0 %v1513
    %2193 = vmatprep.subr.bf16.mxu0 %v1510
    %2194 = vmatpush1.bf16.msra.mxu0 %v1509
    %2195 = vmatprep.subr.bf16.mxu0 %v1506
    %2196 = vmatpush1.bf16.msra.mxu0 %v1505
    %2197 = vmatprep.subr.bf16.mxu0 %v1502
    %2198 = vmatpush1.bf16.msra.mxu0 %v1501
    %2199 = vmatprep.subr.bf16.mxu0 %v1562
    %2200 = vmatpush2.bf16.msra.mxu0 %v1561
    %2201 = vmatprep.subr.bf16.mxu0 %v1558
    %2202 = vmatpush2.bf16.msra.mxu0 %v1557
    %2203 = vmatprep.subr.bf16.mxu0 %v1554
    %2204 = vmatpush2.bf16.msra.mxu0 %v1553
    %2205 = vmatprep.subr.bf16.mxu0 %v1550
    %2206 = vmatpush2.bf16.msra.mxu0 %v1549
    %2207 = vmatprep.subr.bf16.mxu0 %v1546
    %2208 = vmatpush2.bf16.msra.mxu0 %v1545
    %2209 = vmatprep.subr.bf16.mxu0 %v1542
    %2210 = vmatpush2.bf16.msra.mxu0 %v1541
    %2211 = vmatprep.subr.bf16.mxu0 %v1538
    %2212 = vmatpush2.bf16.msra.mxu0 %v1537
    %2213 = vmatprep.subr.bf16.mxu0 %v1534
    %2214 = vmatpush2.bf16.msra.mxu0 %v1533
    %2215 = vmatprep.mubr.bf16.mxu0 %v446
    %2216 = vmatmul.mubr.bf16.gmra.mxu0 %v445
    %v2217 = vpop.f32.mrf.mxu0
    %v2218 = vadd.f32 %v722, %v2217
    %v2219 = vpop.f32.mrf.mxu0
    %v2220 = vadd.f32 %v726, %v2219
    %v2221 = vpop.f32.mrf.mxu0
    %v2222 = vadd.f32 %v722, %v2221
    %v2223 = vpop.f32.mrf.mxu0
    %v2224 = vadd.f32 %v726, %v2223
    %2225 = vdwg.mxu0
    %2226 = vmatprep.subr.bf16.mxu0 %v1594
    %2227 = vmatpush1.bf16.msra.mxu0 %v1593
    %2228 = vmatprep.subr.bf16.mxu0 %v1590
    %2229 = vmatpush1.bf16.msra.mxu0 %v1589
    %2230 = vmatprep.subr.bf16.mxu0 %v1586
    %2231 = vmatpush1.bf16.msra.mxu0 %v1585
    %2232 = vmatprep.subr.bf16.mxu0 %v1582
    %2233 = vmatpush1.bf16.msra.mxu0 %v1581
    %2234 = vmatprep.subr.bf16.mxu0 %v1578
    %2235 = vmatpush1.bf16.msra.mxu0 %v1577
    %2236 = vmatprep.subr.bf16.mxu0 %v1574
    %2237 = vmatpush1.bf16.msra.mxu0 %v1573
    %2238 = vmatprep.subr.bf16.mxu0 %v1570
    %2239 = vmatpush1.bf16.msra.mxu0 %v1569
    %2240 = vmatprep.subr.bf16.mxu0 %v1566
    %2241 = vmatpush1.bf16.msra.mxu0 %v1565
    %2242 = vmatprep.subr.bf16.mxu0 %v1626
    %2243 = vmatpush2.bf16.msra.mxu0 %v1625
    %2244 = vmatprep.subr.bf16.mxu0 %v1622
    %2245 = vmatpush2.bf16.msra.mxu0 %v1621
    %2246 = vmatprep.subr.bf16.mxu0 %v1618
    %2247 = vmatpush2.bf16.msra.mxu0 %v1617
    %2248 = vmatprep.subr.bf16.mxu0 %v1614
    %2249 = vmatpush2.bf16.msra.mxu0 %v1613
    %2250 = vmatprep.subr.bf16.mxu0 %v1610
    %2251 = vmatpush2.bf16.msra.mxu0 %v1609
    %2252 = vmatprep.subr.bf16.mxu0 %v1606
    %2253 = vmatpush2.bf16.msra.mxu0 %v1605
    %2254 = vmatprep.subr.bf16.mxu0 %v1602
    %2255 = vmatpush2.bf16.msra.mxu0 %v1601
    %2256 = vmatprep.subr.bf16.mxu0 %v1598
    %2257 = vmatpush2.bf16.msra.mxu0 %v1597
    %2258 = vmatprep.mubr.bf16.mxu0 %v448
    %2259 = vmatmul.mubr.bf16.gmra.mxu0 %v447
    %v2260 = vpop.f32.mrf.mxu0
    %v2261 = vadd.f32 %v2218, %v2260
    %v2262 = vpop.f32.mrf.mxu0
    %v2263 = vadd.f32 %v2220, %v2262
    %v2264 = vpop.f32.mrf.mxu0
    %v2265 = vadd.f32 %v2222, %v2264
    %v2266 = vpop.f32.mrf.mxu0
    %v2267 = vadd.f32 %v2224, %v2266
    %2268 = vdwg.mxu0
    %2269 = vmatprep.subr.bf16.mxu0 %v1658
    %2270 = vmatpush1.bf16.msra.mxu0 %v1657
    %2271 = vmatprep.subr.bf16.mxu0 %v1654
    %2272 = vmatpush1.bf16.msra.mxu0 %v1653
    %2273 = vmatprep.subr.bf16.mxu0 %v1650
    %2274 = vmatpush1.bf16.msra.mxu0 %v1649
    %2275 = vmatprep.subr.bf16.mxu0 %v1646
    %2276 = vmatpush1.bf16.msra.mxu0 %v1645
    %2277 = vmatprep.subr.bf16.mxu0 %v1642
    %2278 = vmatpush1.bf16.msra.mxu0 %v1641
    %2279 = vmatprep.subr.bf16.mxu0 %v1638
    %2280 = vmatpush1.bf16.msra.mxu0 %v1637
    %2281 = vmatprep.subr.bf16.mxu0 %v1634
    %2282 = vmatpush1.bf16.msra.mxu0 %v1633
    %2283 = vmatprep.subr.bf16.mxu0 %v1630
    %2284 = vmatpush1.bf16.msra.mxu0 %v1629
    %2285 = vmatprep.subr.bf16.mxu0 %v1690
    %2286 = vmatpush2.bf16.msra.mxu0 %v1689
    %2287 = vmatprep.subr.bf16.mxu0 %v1686
    %2288 = vmatpush2.bf16.msra.mxu0 %v1685
    %2289 = vmatprep.subr.bf16.mxu0 %v1682
    %2290 = vmatpush2.bf16.msra.mxu0 %v1681
    %2291 = vmatprep.subr.bf16.mxu0 %v1678
    %2292 = vmatpush2.bf16.msra.mxu0 %v1677
    %2293 = vmatprep.subr.bf16.mxu0 %v1674
    %2294 = vmatpush2.bf16.msra.mxu0 %v1673
    %2295 = vmatprep.subr.bf16.mxu0 %v1670
    %2296 = vmatpush2.bf16.msra.mxu0 %v1669
    %2297 = vmatprep.subr.bf16.mxu0 %v1666
    %2298 = vmatpush2.bf16.msra.mxu0 %v1665
    %2299 = vmatprep.subr.bf16.mxu0 %v1662
    %2300 = vmatpush2.bf16.msra.mxu0 %v1661
    %2301 = vmatprep.mubr.bf16.mxu0 %v450
    %2302 = vmatmul.mubr.bf16.gmra.mxu0 %v449
    %v2303 = vpop.f32.mrf.mxu0
    %v2304 = vadd.f32 %v2261, %v2303
    %v2305 = vpop.f32.mrf.mxu0
    %v2306 = vadd.f32 %v2263, %v2305
    %v2307 = vpop.f32.mrf.mxu0
    %v2308 = vadd.f32 %v2265, %v2307
    %v2309 = vpop.f32.mrf.mxu0
    %v2310 = vadd.f32 %v2267, %v2309
    %2311 = vdwg.mxu0
    %2312 = vmatprep.subr.bf16.mxu0 %v1722
    %2313 = vmatpush1.bf16.msra.mxu0 %v1721
    %2314 = vmatprep.subr.bf16.mxu0 %v1718
    %2315 = vmatpush1.bf16.msra.mxu0 %v1717
    %2316 = vmatprep.subr.bf16.mxu0 %v1714
    %2317 = vmatpush1.bf16.msra.mxu0 %v1713
    %2318 = vmatprep.subr.bf16.mxu0 %v1710
    %2319 = vmatpush1.bf16.msra.mxu0 %v1709
    %2320 = vmatprep.subr.bf16.mxu0 %v1706
    %2321 = vmatpush1.bf16.msra.mxu0 %v1705
    %2322 = vmatprep.subr.bf16.mxu0 %v1702
    %2323 = vmatpush1.bf16.msra.mxu0 %v1701
    %2324 = vmatprep.subr.bf16.mxu0 %v1698
    %2325 = vmatpush1.bf16.msra.mxu0 %v1697
    %2326 = vmatprep.subr.bf16.mxu0 %v1694
    %2327 = vmatpush1.bf16.msra.mxu0 %v1693
    %2328 = vmatprep.subr.bf16.mxu0 %v1754
    %2329 = vmatpush2.bf16.msra.mxu0 %v1753
    %2330 = vmatprep.subr.bf16.mxu0 %v1750
    %2331 = vmatpush2.bf16.msra.mxu0 %v1749
    %2332 = vmatprep.subr.bf16.mxu0 %v1746
    %2333 = vmatpush2.bf16.msra.mxu0 %v1745
    %2334 = vmatprep.subr.bf16.mxu0 %v1742
    %2335 = vmatpush2.bf16.msra.mxu0 %v1741
    %2336 = vmatprep.subr.bf16.mxu0 %v1738
    %2337 = vmatpush2.bf16.msra.mxu0 %v1737
    %2338 = vmatprep.subr.bf16.mxu0 %v1734
    %2339 = vmatpush2.bf16.msra.mxu0 %v1733
    %2340 = vmatprep.subr.bf16.mxu0 %v1730
    %2341 = vmatpush2.bf16.msra.mxu0 %v1729
    %2342 = vmatprep.subr.bf16.mxu0 %v1726
    %2343 = vmatpush2.bf16.msra.mxu0 %v1725
    %2344 = vmatprep.mubr.bf16.mxu0 %v452
    %2345 = vmatmul.mubr.bf16.gmra.mxu0 %v451
    %v2346 = vpop.f32.mrf.mxu0
    %v2347 = vadd.f32 %v2304, %v2346
    %v2348 = vpop.f32.mrf.mxu0
    %v2349 = vadd.f32 %v2306, %v2348
    %v2350 = vpop.f32.mrf.mxu0
    %v2351 = vadd.f32 %v2308, %v2350
    %v2352 = vpop.f32.mrf.mxu0
    %v2353 = vadd.f32 %v2310, %v2352
    %2354 = vdwg.mxu0
    %v2355 = vld [vmem:[%s1] sm:$0xf]
    %v2356 = vld [vmem:[%s1 + $0x4] sm:$0xf]
    %v2357 = vunpack.c.l.bf16 %v2355
    %v2358 = vunpack.c.l.bf16 %v2356
    %v2359 = vld [vmem:[%s5] sm:$0x77]
    %v2360 = vld [vmem:[%s5 + $0x8] sm:$0x77]
    %v2361 = vunpack.c.l.bf16 %v2359
    %v2362 = vunpack.c.h.bf16 %v2359
    %v2363 = vunpack.c.l.bf16 %v2360
    %v2364 = vunpack.c.h.bf16 %v2360
    %2366 = vset.pattern.permute.xlu0 0
    %2367 = vperm.xlu0 %2366, %v2357
    %v2368 = vpop.permute.xlu0 %2367
    %2371 = vset.pattern.permute.xlu0 0
    %2372 = vperm.xlu0 %2371, %v2358
    %v2373 = vpop.permute.xlu0 %2372
    %v2375 = vlaneseq
    %v2376 = vshrl.u32 %v2375, 7
    %v2377 = vsub.s32 0, %v2376
    %v2378 = vrot.slane %v2361, %v2377
    %v2379 = vlaneseq
    %v2380 = vshrl.u32 %v2379, 7
    %v2381 = vsub.s32 0, %v2380
    %v2382 = vrot.slane %v2362, %v2381
    %v2383 = vlaneseq
    %v2384 = vshrl.u32 %v2383, 7
    %v2385 = vsub.s32 0, %v2384
    %v2386 = vrot.slane %v2363, %v2385
    %v2387 = vlaneseq
    %v2388 = vshrl.u32 %v2387, 7
    %v2389 = vsub.s32 0, %v2388
    %v2390 = vrot.slane %v2364, %v2389
    %v2391 = vmul.f32 %v2368, %v2378
    %v2392 = vmul.f32 %v2368, %v2382
    %v2393 = vmul.f32 %v2368, %v2386
    %v2394 = vmul.f32 %v2368, %v2390
    %v2395 = vmul.f32 %v2373, %v2378
    %v2396 = vmul.f32 %v2373, %v2382
    %v2397 = vmul.f32 %v2373, %v2386
    %v2398 = vmul.f32 %v2373, %v2390
    %v2399 = vadd.f32 %v2175, %v2391
    %v2400 = vadd.f32 %v2177, %v2392
    %v2401 = vadd.f32 %v2347, %v2393
    %v2402 = vadd.f32 %v2349, %v2394
    %v2403 = vadd.f32 %v2179, %v2395
    %v2404 = vadd.f32 %v2181, %v2396
    %v2405 = vadd.f32 %v2351, %v2397
    %v2406 = vadd.f32 %v2353, %v2398
    %2407 = vset.pattern.permute.xlu0 1
    %2408 = vperm.xlu0 %2407, %v2357
    %v2409 = vpop.permute.xlu0 %2408
    %2411 = vset.pattern.permute.xlu0 1
    %2412 = vperm.xlu0 %2411, %v2358
    %v2413 = vpop.permute.xlu0 %2412
    %v2415 = vlaneseq
    %v2416 = vshrl.u32 %v2415, 7
    %v2417 = vsub.s32 1, %v2416
    %v2418 = vrot.slane %v2361, %v2417
    %v2419 = vlaneseq
    %v2420 = vshrl.u32 %v2419, 7
    %v2421 = vsub.s32 1, %v2420
    %v2422 = vrot.slane %v2362, %v2421
    %v2423 = vlaneseq
    %v2424 = vshrl.u32 %v2423, 7
    %v2425 = vsub.s32 1, %v2424
    %v2426 = vrot.slane %v2363, %v2425
    %v2427 = vlaneseq
    %v2428 = vshrl.u32 %v2427, 7
    %v2429 = vsub.s32 1, %v2428
    %v2430 = vrot.slane %v2364, %v2429
    %v2431 = vmul.f32 %v2409, %v2418
    %v2432 = vmul.f32 %v2409, %v2422
    %v2433 = vmul.f32 %v2409, %v2426
    %v2434 = vmul.f32 %v2409, %v2430
    %v2435 = vmul.f32 %v2413, %v2418
    %v2436 = vmul.f32 %v2413, %v2422
    %v2437 = vmul.f32 %v2413, %v2426
    %v2438 = vmul.f32 %v2413, %v2430
    %v2439 = vadd.f32 %v2399, %v2431
    %v2440 = vadd.f32 %v2400, %v2432
    %v2441 = vadd.f32 %v2401, %v2433
    %v2442 = vadd.f32 %v2402, %v2434
    %v2443 = vadd.f32 %v2403, %v2435
    %v2444 = vadd.f32 %v2404, %v2436
    %v2445 = vadd.f32 %v2405, %v2437
    %v2446 = vadd.f32 %v2406, %v2438
    %2447 = vset.pattern.permute.xlu0 2
    %2448 = vperm.xlu0 %2447, %v2357
    %v2449 = vpop.permute.xlu0 %2448
    %2451 = vset.pattern.permute.xlu0 2
    %2452 = vperm.xlu0 %2451, %v2358
    %v2453 = vpop.permute.xlu0 %2452
    %v2455 = vlaneseq
    %v2456 = vshrl.u32 %v2455, 7
    %v2457 = vsub.s32 2, %v2456
    %v2458 = vrot.slane %v2361, %v2457
    %v2459 = vlaneseq
    %v2460 = vshrl.u32 %v2459, 7
    %v2461 = vsub.s32 2, %v2460
    %v2462 = vrot.slane %v2362, %v2461
    %v2463 = vlaneseq
    %v2464 = vshrl.u32 %v2463, 7
    %v2465 = vsub.s32 2, %v2464
    %v2466 = vrot.slane %v2363, %v2465
    %v2467 = vlaneseq
    %v2468 = vshrl.u32 %v2467, 7
    %v2469 = vsub.s32 2, %v2468
    %v2470 = vrot.slane %v2364, %v2469
    %v2471 = vmul.f32 %v2449, %v2458
    %v2472 = vmul.f32 %v2449, %v2462
    %v2473 = vmul.f32 %v2449, %v2466
    %v2474 = vmul.f32 %v2449, %v2470
    %v2475 = vmul.f32 %v2453, %v2458
    %v2476 = vmul.f32 %v2453, %v2462
    %v2477 = vmul.f32 %v2453, %v2466
    %v2478 = vmul.f32 %v2453, %v2470
    %v2479 = vadd.f32 %v2439, %v2471
    %v2480 = vadd.f32 %v2440, %v2472
    %v2481 = vadd.f32 %v2441, %v2473
    %v2482 = vadd.f32 %v2442, %v2474
    %v2483 = vadd.f32 %v2443, %v2475
    %v2484 = vadd.f32 %v2444, %v2476
    %v2485 = vadd.f32 %v2445, %v2477
    %v2486 = vadd.f32 %v2446, %v2478
    %2487 = vset.pattern.permute.xlu0 3
    %2488 = vperm.xlu0 %2487, %v2357
    %v2489 = vpop.permute.xlu0 %2488
    %2491 = vset.pattern.permute.xlu0 3
    %2492 = vperm.xlu0 %2491, %v2358
    %v2493 = vpop.permute.xlu0 %2492
    %v2495 = vlaneseq
    %v2496 = vshrl.u32 %v2495, 7
    %v2497 = vsub.s32 3, %v2496
    %v2498 = vrot.slane %v2361, %v2497
    %v2499 = vlaneseq
    %v2500 = vshrl.u32 %v2499, 7
    %v2501 = vsub.s32 3, %v2500
    %v2502 = vrot.slane %v2362, %v2501
    %v2503 = vlaneseq
    %v2504 = vshrl.u32 %v2503, 7
    %v2505 = vsub.s32 3, %v2504
    %v2506 = vrot.slane %v2363, %v2505
    %v2507 = vlaneseq
    %v2508 = vshrl.u32 %v2507, 7
    %v2509 = vsub.s32 3, %v2508
    %v2510 = vrot.slane %v2364, %v2509
    %v2511 = vmul.f32 %v2489, %v2498
    %v2512 = vmul.f32 %v2489, %v2502
    %v2513 = vmul.f32 %v2489, %v2506
    %v2514 = vmul.f32 %v2489, %v2510
    %v2515 = vmul.f32 %v2493, %v2498
    %v2516 = vmul.f32 %v2493, %v2502
    %v2517 = vmul.f32 %v2493, %v2506
    %v2518 = vmul.f32 %v2493, %v2510
    %v2519 = vadd.f32 %v2479, %v2511
    %v2520 = vadd.f32 %v2480, %v2512
    %v2521 = vadd.f32 %v2481, %v2513
    %v2522 = vadd.f32 %v2482, %v2514
    %v2523 = vadd.f32 %v2483, %v2515
    %v2524 = vadd.f32 %v2484, %v2516
    %v2525 = vadd.f32 %v2485, %v2517
    %v2526 = vadd.f32 %v2486, %v2518
    %2527 = vset.pattern.permute.xlu0 4
    %2528 = vperm.xlu0 %2527, %v2357
    %v2529 = vpop.permute.xlu0 %2528
    %2531 = vset.pattern.permute.xlu0 4
    %2532 = vperm.xlu0 %2531, %v2358
    %v2533 = vpop.permute.xlu0 %2532
    %v2535 = vlaneseq
    %v2536 = vshrl.u32 %v2535, 7
    %v2537 = vsub.s32 4, %v2536
    %v2538 = vrot.slane %v2361, %v2537
    %v2539 = vlaneseq
    %v2540 = vshrl.u32 %v2539, 7
    %v2541 = vsub.s32 4, %v2540
    %v2542 = vrot.slane %v2362, %v2541
    %v2543 = vlaneseq
    %v2544 = vshrl.u32 %v2543, 7
    %v2545 = vsub.s32 4, %v2544
    %v2546 = vrot.slane %v2363, %v2545
    %v2547 = vlaneseq
    %v2548 = vshrl.u32 %v2547, 7
    %v2549 = vsub.s32 4, %v2548
    %v2550 = vrot.slane %v2364, %v2549
    %v2551 = vmul.f32 %v2529, %v2538
    %v2552 = vmul.f32 %v2529, %v2542
    %v2553 = vmul.f32 %v2529, %v2546
    %v2554 = vmul.f32 %v2529, %v2550
    %v2555 = vmul.f32 %v2533, %v2538
    %v2556 = vmul.f32 %v2533, %v2542
    %v2557 = vmul.f32 %v2533, %v2546
    %v2558 = vmul.f32 %v2533, %v2550
    %v2559 = vadd.f32 %v2519, %v2551
    %v2560 = vadd.f32 %v2520, %v2552
    %v2561 = vadd.f32 %v2521, %v2553
    %v2562 = vadd.f32 %v2522, %v2554
    %v2563 = vadd.f32 %v2523, %v2555
    %v2564 = vadd.f32 %v2524, %v2556
    %v2565 = vadd.f32 %v2525, %v2557
    %v2566 = vadd.f32 %v2526, %v2558
    %2567 = vset.pattern.permute.xlu0 5
    %2568 = vperm.xlu0 %2567, %v2357
    %v2569 = vpop.permute.xlu0 %2568
    %2571 = vset.pattern.permute.xlu0 5
    %2572 = vperm.xlu0 %2571, %v2358
    %v2573 = vpop.permute.xlu0 %2572
    %v2575 = vlaneseq
    %v2576 = vshrl.u32 %v2575, 7
    %v2577 = vsub.s32 5, %v2576
    %v2578 = vrot.slane %v2361, %v2577
    %v2579 = vlaneseq
    %v2580 = vshrl.u32 %v2579, 7
    %v2581 = vsub.s32 5, %v2580
    %v2582 = vrot.slane %v2362, %v2581
    %v2583 = vlaneseq
    %v2584 = vshrl.u32 %v2583, 7
    %v2585 = vsub.s32 5, %v2584
    %v2586 = vrot.slane %v2363, %v2585
    %v2587 = vlaneseq
    %v2588 = vshrl.u32 %v2587, 7
    %v2589 = vsub.s32 5, %v2588
    %v2590 = vrot.slane %v2364, %v2589
    %v2591 = vmul.f32 %v2569, %v2578
    %v2592 = vmul.f32 %v2569, %v2582
    %v2593 = vmul.f32 %v2569, %v2586
    %v2594 = vmul.f32 %v2569, %v2590
    %v2595 = vmul.f32 %v2573, %v2578
    %v2596 = vmul.f32 %v2573, %v2582
    %v2597 = vmul.f32 %v2573, %v2586
    %v2598 = vmul.f32 %v2573, %v2590
    %v2599 = vadd.f32 %v2559, %v2591
    %v2600 = vadd.f32 %v2560, %v2592
    %v2601 = vadd.f32 %v2561, %v2593
    %v2602 = vadd.f32 %v2562, %v2594
    %v2603 = vadd.f32 %v2563, %v2595
    %v2604 = vadd.f32 %v2564, %v2596
    %v2605 = vadd.f32 %v2565, %v2597
    %v2606 = vadd.f32 %v2566, %v2598
    %v2607 = vmax.f32 %v2599, 0.0
    %v2608 = vmax.f32 %v2600, 0.0
    %v2609 = vmax.f32 %v2601, 0.0
    %v2610 = vmax.f32 %v2602, 0.0
    %v2611 = vmax.f32 %v2603, 0.0
    %v2612 = vmax.f32 %v2604, 0.0
    %v2613 = vmax.f32 %v2605, 0.0
    %v2614 = vmax.f32 %v2606, 0.0
    %v2615 = vpack.c.bf16 %v2611, %v2607
    %v2616 = vpack.c.bf16 %v2612, %v2608
    %v2617 = vpack.c.bf16 %v2613, %v2609
    %v2618 = vpack.c.bf16 %v2614, %v2610
    %v2619 = vld [vmem:[#allocation11] sm:$0xff]
    %v2620 = vld [vmem:[#allocation11 + $0x8] sm:$0xff]
    %v2621 = vld [vmem:[#allocation11 + $0x10] sm:$0xff]
    %v2622 = vld [vmem:[#allocation11 + $0x18] sm:$0xff]
    %v2623 = vld [vmem:[#allocation11 + $0x20] sm:$0xff]
    %v2624 = vld [vmem:[#allocation11 + $0x28] sm:$0xff]
    %v2625 = vld [vmem:[#allocation11 + $0x30] sm:$0xff]
    %v2626 = vld [vmem:[#allocation11 + $0x38] sm:$0xff]
    %v2627 = vld [vmem:[#allocation11 + $0x40] sm:$0xff]
    %v2628 = vld [vmem:[#allocation11 + $0x48] sm:$0xff]
    %v2629 = vld [vmem:[#allocation11 + $0x50] sm:$0xff]
    %v2630 = vld [vmem:[#allocation11 + $0x58] sm:$0xff]
    %v2631 = vld [vmem:[#allocation11 + $0x60] sm:$0xff]
    %v2632 = vld [vmem:[#allocation11 + $0x68] sm:$0xff]
    %v2633 = vld [vmem:[#allocation11 + $0x70] sm:$0xff]
    %v2634 = vld [vmem:[#allocation11 + $0x78] sm:$0xff]
    %v2635 = vld [vmem:[#allocation11 + $0x80] sm:$0xff]
    %v2636 = vld [vmem:[#allocation11 + $0x88] sm:$0xff]
    %v2637 = vld [vmem:[#allocation11 + $0x90] sm:$0xff]
    %v2638 = vld [vmem:[#allocation11 + $0x98] sm:$0xff]
    %v2639 = vld [vmem:[#allocation11 + $0xa0] sm:$0xff]
    %v2640 = vld [vmem:[#allocation11 + $0xa8] sm:$0xff]
    %v2641 = vld [vmem:[#allocation11 + $0xb0] sm:$0xff]
    %v2642 = vld [vmem:[#allocation11 + $0xb8] sm:$0xff]
    %v2643 = vld [vmem:[#allocation11 + $0xc0] sm:$0xff]
    %v2644 = vld [vmem:[#allocation11 + $0xc8] sm:$0xff]
    %v2645 = vld [vmem:[#allocation11 + $0xd0] sm:$0xff]
    %v2646 = vld [vmem:[#allocation11 + $0xd8] sm:$0xff]
    %v2647 = vld [vmem:[#allocation11 + $0xe0] sm:$0xff]
    %v2648 = vld [vmem:[#allocation11 + $0xe8] sm:$0xff]
    %v2649 = vld [vmem:[#allocation11 + $0xf0] sm:$0xff]
    %v2650 = vld [vmem:[#allocation11 + $0xf8] sm:$0xff]
    %v2651 = vld [vmem:[#allocation11 + $0x100] sm:$0xff]
    %v2652 = vld [vmem:[#allocation11 + $0x108] sm:$0xff]
    %v2653 = vld [vmem:[#allocation11 + $0x110] sm:$0xff]
    %v2654 = vld [vmem:[#allocation11 + $0x118] sm:$0xff]
    %v2655 = vld [vmem:[#allocation11 + $0x120] sm:$0xff]
    %v2656 = vld [vmem:[#allocation11 + $0x128] sm:$0xff]
    %v2657 = vld [vmem:[#allocation11 + $0x130] sm:$0xff]
    %v2658 = vld [vmem:[#allocation11 + $0x138] sm:$0xff]
    %v2659 = vld [vmem:[#allocation11 + $0x140] sm:$0xff]
    %v2660 = vld [vmem:[#allocation11 + $0x148] sm:$0xff]
    %v2661 = vld [vmem:[#allocation11 + $0x150] sm:$0xff]
    %v2662 = vld [vmem:[#allocation11 + $0x158] sm:$0xff]
    %v2663 = vld [vmem:[#allocation11 + $0x160] sm:$0xff]
    %v2664 = vld [vmem:[#allocation11 + $0x168] sm:$0xff]
    %v2665 = vld [vmem:[#allocation11 + $0x170] sm:$0xff]
    %v2666 = vld [vmem:[#allocation11 + $0x178] sm:$0xff]
    %v2667 = vld [vmem:[#allocation11 + $0x180] sm:$0xff]
    %v2668 = vld [vmem:[#allocation11 + $0x188] sm:$0xff]
    %v2669 = vld [vmem:[#allocation11 + $0x190] sm:$0xff]
    %v2670 = vld [vmem:[#allocation11 + $0x198] sm:$0xff]
    %v2671 = vld [vmem:[#allocation11 + $0x1a0] sm:$0xff]
    %v2672 = vld [vmem:[#allocation11 + $0x1a8] sm:$0xff]
    %v2673 = vld [vmem:[#allocation11 + $0x1b0] sm:$0xff]
    %v2674 = vld [vmem:[#allocation11 + $0x1b8] sm:$0xff]
    %v2675 = vld [vmem:[#allocation11 + $0x1c0] sm:$0xff]
    %v2676 = vld [vmem:[#allocation11 + $0x1c8] sm:$0xff]
    %v2677 = vld [vmem:[#allocation11 + $0x1d0] sm:$0xff]
    %v2678 = vld [vmem:[#allocation11 + $0x1d8] sm:$0xff]
    %v2679 = vld [vmem:[#allocation11 + $0x1e0] sm:$0xff]
    %v2680 = vld [vmem:[#allocation11 + $0x1e8] sm:$0xff]
    %v2681 = vld [vmem:[#allocation11 + $0x1f0] sm:$0xff]
    %v2682 = vld [vmem:[#allocation11 + $0x1f8] sm:$0xff]
    %v2683 = vld [vmem:[%s8] sm:$0x3]
    %v2685 = vlaneseq
    %v2686 = vshrl.u32 %v2685, 7
    %v2687 = vsub.s32 0, %v2686
    %v2688 = vrot.slane %v2683, %v2687
    %v2689 = vlaneseq
    %v2690 = vshrl.u32 %v2689, 7
    %v2691 = vsub.s32 1, %v2690
    %v2692 = vrot.slane %v2683, %v2691
    %v2759 = vunpack.c.l.b16 %v2619
    %v2760 = vunpack.c.h.b16 %v2619
    %v2761 = vunpack.c.l.b16 %v2620
    %v2762 = vunpack.c.h.b16 %v2620
    %v2763 = vunpack.c.l.b16 %v2621
    %v2764 = vunpack.c.h.b16 %v2621
    %v2765 = vunpack.c.l.b16 %v2622
    %v2766 = vunpack.c.h.b16 %v2622
    %v2767 = vunpack.c.l.b16 %v2623
    %v2768 = vunpack.c.h.b16 %v2623
    %v2769 = vunpack.c.l.b16 %v2624
    %v2770 = vunpack.c.h.b16 %v2624
    %v2771 = vunpack.c.l.b16 %v2625
    %v2772 = vunpack.c.h.b16 %v2625
    %v2773 = vunpack.c.l.b16 %v2626
    %v2774 = vunpack.c.h.b16 %v2626
    %v2775 = vunpack.c.l.b16 %v2627
    %v2776 = vunpack.c.h.b16 %v2627
    %v2777 = vunpack.c.l.b16 %v2628
    %v2778 = vunpack.c.h.b16 %v2628
    %v2779 = vunpack.c.l.b16 %v2629
    %v2780 = vunpack.c.h.b16 %v2629
    %v2781 = vunpack.c.l.b16 %v2630
    %v2782 = vunpack.c.h.b16 %v2630
    %v2783 = vunpack.c.l.b16 %v2631
    %v2784 = vunpack.c.h.b16 %v2631
    %v2785 = vunpack.c.l.b16 %v2632
    %v2786 = vunpack.c.h.b16 %v2632
    %v2787 = vunpack.c.l.b16 %v2633
    %v2788 = vunpack.c.h.b16 %v2633
    %v2789 = vunpack.c.l.b16 %v2634
    %v2790 = vunpack.c.h.b16 %v2634
    %v2791 = vunpack.c.l.b16 %v2635
    %v2792 = vunpack.c.h.b16 %v2635
    %v2793 = vunpack.c.l.b16 %v2636
    %v2794 = vunpack.c.h.b16 %v2636
    %v2795 = vunpack.c.l.b16 %v2637
    %v2796 = vunpack.c.h.b16 %v2637
    %v2797 = vunpack.c.l.b16 %v2638
    %v2798 = vunpack.c.h.b16 %v2638
    %v2799 = vunpack.c.l.b16 %v2639
    %v2800 = vunpack.c.h.b16 %v2639
    %v2801 = vunpack.c.l.b16 %v2640
    %v2802 = vunpack.c.h.b16 %v2640
    %v2803 = vunpack.c.l.b16 %v2641
    %v2804 = vunpack.c.h.b16 %v2641
    %v2805 = vunpack.c.l.b16 %v2642
    %v2806 = vunpack.c.h.b16 %v2642
    %v2807 = vunpack.c.l.b16 %v2643
    %v2808 = vunpack.c.h.b16 %v2643
    %v2809 = vunpack.c.l.b16 %v2644
    %v2810 = vunpack.c.h.b16 %v2644
    %v2811 = vunpack.c.l.b16 %v2645
    %v2812 = vunpack.c.h.b16 %v2645
    %v2813 = vunpack.c.l.b16 %v2646
    %v2814 = vunpack.c.h.b16 %v2646
    %v2815 = vunpack.c.l.b16 %v2647
    %v2816 = vunpack.c.h.b16 %v2647
    %v2817 = vunpack.c.l.b16 %v2648
    %v2818 = vunpack.c.h.b16 %v2648
    %v2819 = vunpack.c.l.b16 %v2649
    %v2820 = vunpack.c.h.b16 %v2649
    %v2821 = vunpack.c.l.b16 %v2650
    %v2822 = vunpack.c.h.b16 %v2650
    %v2823 = vunpack.c.l.b16 %v2651
    %v2824 = vunpack.c.h.b16 %v2651
    %v2825 = vunpack.c.l.b16 %v2652
    %v2826 = vunpack.c.h.b16 %v2652
    %v2827 = vunpack.c.l.b16 %v2653
    %v2828 = vunpack.c.h.b16 %v2653
    %v2829 = vunpack.c.l.b16 %v2654
    %v2830 = vunpack.c.h.b16 %v2654
    %v2831 = vunpack.c.l.b16 %v2655
    %v2832 = vunpack.c.h.b16 %v2655
    %v2833 = vunpack.c.l.b16 %v2656
    %v2834 = vunpack.c.h.b16 %v2656
    %v2835 = vunpack.c.l.b16 %v2657
    %v2836 = vunpack.c.h.b16 %v2657
    %v2837 = vunpack.c.l.b16 %v2658
    %v2838 = vunpack.c.h.b16 %v2658
    %v2839 = vunpack.c.l.b16 %v2659
    %v2840 = vunpack.c.h.b16 %v2659
    %v2841 = vunpack.c.l.b16 %v2660
    %v2842 = vunpack.c.h.b16 %v2660
    %v2843 = vunpack.c.l.b16 %v2661
    %v2844 = vunpack.c.h.b16 %v2661
    %v2845 = vunpack.c.l.b16 %v2662
    %v2846 = vunpack.c.h.b16 %v2662
    %v2847 = vunpack.c.l.b16 %v2663
    %v2848 = vunpack.c.h.b16 %v2663
    %v2849 = vunpack.c.l.b16 %v2664
    %v2850 = vunpack.c.h.b16 %v2664
    %v2851 = vunpack.c.l.b16 %v2665
    %v2852 = vunpack.c.h.b16 %v2665
    %v2853 = vunpack.c.l.b16 %v2666
    %v2854 = vunpack.c.h.b16 %v2666
    %v2855 = vunpack.c.l.b16 %v2667
    %v2856 = vunpack.c.h.b16 %v2667
    %v2857 = vunpack.c.l.b16 %v2668
    %v2858 = vunpack.c.h.b16 %v2668
    %v2859 = vunpack.c.l.b16 %v2669
    %v2860 = vunpack.c.h.b16 %v2669
    %v2861 = vunpack.c.l.b16 %v2670
    %v2862 = vunpack.c.h.b16 %v2670
    %v2863 = vunpack.c.l.b16 %v2671
    %v2864 = vunpack.c.h.b16 %v2671
    %v2865 = vunpack.c.l.b16 %v2672
    %v2866 = vunpack.c.h.b16 %v2672
    %v2867 = vunpack.c.l.b16 %v2673
    %v2868 = vunpack.c.h.b16 %v2673
    %v2869 = vunpack.c.l.b16 %v2674
    %v2870 = vunpack.c.h.b16 %v2674
    %v2871 = vunpack.c.l.b16 %v2675
    %v2872 = vunpack.c.h.b16 %v2675
    %v2873 = vunpack.c.l.b16 %v2676
    %v2874 = vunpack.c.h.b16 %v2676
    %v2875 = vunpack.c.l.b16 %v2677
    %v2876 = vunpack.c.h.b16 %v2677
    %v2877 = vunpack.c.l.b16 %v2678
    %v2878 = vunpack.c.h.b16 %v2678
    %v2879 = vunpack.c.l.b16 %v2679
    %v2880 = vunpack.c.h.b16 %v2679
    %v2881 = vunpack.c.l.b16 %v2680
    %v2882 = vunpack.c.h.b16 %v2680
    %v2883 = vunpack.c.l.b16 %v2681
    %v2884 = vunpack.c.h.b16 %v2681
    %v2885 = vunpack.c.l.b16 %v2682
    %v2886 = vunpack.c.h.b16 %v2682
    %v2887 = vpack.c.b16 %v2761, %v2759
    %v2888 = vpack.c.b16 %v2762, %v2760
    %v2889 = vpack.c.b16 %v2765, %v2763
    %v2890 = vpack.c.b16 %v2766, %v2764
    %v2891 = vpack.c.b16 %v2769, %v2767
    %v2892 = vpack.c.b16 %v2770, %v2768
    %v2893 = vpack.c.b16 %v2773, %v2771
    %v2894 = vpack.c.b16 %v2774, %v2772
    %v2895 = vpack.c.b16 %v2777, %v2775
    %v2896 = vpack.c.b16 %v2778, %v2776
    %v2897 = vpack.c.b16 %v2781, %v2779
    %v2898 = vpack.c.b16 %v2782, %v2780
    %v2899 = vpack.c.b16 %v2785, %v2783
    %v2900 = vpack.c.b16 %v2786, %v2784
    %v2901 = vpack.c.b16 %v2789, %v2787
    %v2902 = vpack.c.b16 %v2790, %v2788
    %v2903 = vpack.c.b16 %v2793, %v2791
    %v2904 = vpack.c.b16 %v2794, %v2792
    %v2905 = vpack.c.b16 %v2797, %v2795
    %v2906 = vpack.c.b16 %v2798, %v2796
    %v2907 = vpack.c.b16 %v2801, %v2799
    %v2908 = vpack.c.b16 %v2802, %v2800
    %v2909 = vpack.c.b16 %v2805, %v2803
    %v2910 = vpack.c.b16 %v2806, %v2804
    %v2911 = vpack.c.b16 %v2809, %v2807
    %v2912 = vpack.c.b16 %v2810, %v2808
    %v2913 = vpack.c.b16 %v2813, %v2811
    %v2914 = vpack.c.b16 %v2814, %v2812
    %v2915 = vpack.c.b16 %v2817, %v2815
    %v2916 = vpack.c.b16 %v2818, %v2816
    %v2917 = vpack.c.b16 %v2821, %v2819
    %v2918 = vpack.c.b16 %v2822, %v2820
    %v2919 = vpack.c.b16 %v2825, %v2823
    %v2920 = vpack.c.b16 %v2826, %v2824
    %v2921 = vpack.c.b16 %v2829, %v2827
    %v2922 = vpack.c.b16 %v2830, %v2828
    %v2923 = vpack.c.b16 %v2833, %v2831
    %v2924 = vpack.c.b16 %v2834, %v2832
    %v2925 = vpack.c.b16 %v2837, %v2835
    %v2926 = vpack.c.b16 %v2838, %v2836
    %v2927 = vpack.c.b16 %v2841, %v2839
    %v2928 = vpack.c.b16 %v2842, %v2840
    %v2929 = vpack.c.b16 %v2845, %v2843
    %v2930 = vpack.c.b16 %v2846, %v2844
    %v2931 = vpack.c.b16 %v2849, %v2847
    %v2932 = vpack.c.b16 %v2850, %v2848
    %v2933 = vpack.c.b16 %v2853, %v2851
    %v2934 = vpack.c.b16 %v2854, %v2852
    %v2935 = vpack.c.b16 %v2857, %v2855
    %v2936 = vpack.c.b16 %v2858, %v2856
    %v2937 = vpack.c.b16 %v2861, %v2859
    %v2938 = vpack.c.b16 %v2862, %v2860
    %v2939 = vpack.c.b16 %v2865, %v2863
    %v2940 = vpack.c.b16 %v2866, %v2864
    %v2941 = vpack.c.b16 %v2869, %v2867
    %v2942 = vpack.c.b16 %v2870, %v2868
    %v2943 = vpack.c.b16 %v2873, %v2871
    %v2944 = vpack.c.b16 %v2874, %v2872
    %v2945 = vpack.c.b16 %v2877, %v2875
    %v2946 = vpack.c.b16 %v2878, %v2876
    %v2947 = vpack.c.b16 %v2881, %v2879
    %v2948 = vpack.c.b16 %v2882, %v2880
    %v2949 = vpack.c.b16 %v2885, %v2883
    %v2950 = vpack.c.b16 %v2886, %v2884
    %3015 = vmatprep.subr.bf16.mxu0 %v2902
    %3016 = vmatpush1.bf16.msra.mxu0 %v2901
    %3017 = vmatprep.subr.bf16.mxu0 %v2900
    %3018 = vmatpush1.bf16.msra.mxu0 %v2899
    %3019 = vmatprep.subr.bf16.mxu0 %v2898
    %3020 = vmatpush1.bf16.msra.mxu0 %v2897
    %3021 = vmatprep.subr.bf16.mxu0 %v2896
    %3022 = vmatpush1.bf16.msra.mxu0 %v2895
    %3023 = vmatprep.subr.bf16.mxu0 %v2894
    %3024 = vmatpush1.bf16.msra.mxu0 %v2893
    %3025 = vmatprep.subr.bf16.mxu0 %v2892
    %3026 = vmatpush1.bf16.msra.mxu0 %v2891
    %3027 = vmatprep.subr.bf16.mxu0 %v2890
    %3028 = vmatpush1.bf16.msra.mxu0 %v2889
    %3029 = vmatprep.subr.bf16.mxu0 %v2888
    %3030 = vmatpush1.bf16.msra.mxu0 %v2887
    %3031 = vmatprep.subr.bf16.mxu0 %v2918
    %3032 = vmatpush2.bf16.msra.mxu0 %v2917
    %3033 = vmatprep.subr.bf16.mxu0 %v2916
    %3034 = vmatpush2.bf16.msra.mxu0 %v2915
    %3035 = vmatprep.subr.bf16.mxu0 %v2914
    %3036 = vmatpush2.bf16.msra.mxu0 %v2913
    %3037 = vmatprep.subr.bf16.mxu0 %v2912
    %3038 = vmatpush2.bf16.msra.mxu0 %v2911
    %3039 = vmatprep.subr.bf16.mxu0 %v2910
    %3040 = vmatpush2.bf16.msra.mxu0 %v2909
    %3041 = vmatprep.subr.bf16.mxu0 %v2908
    %3042 = vmatpush2.bf16.msra.mxu0 %v2907
    %3043 = vmatprep.subr.bf16.mxu0 %v2906
    %3044 = vmatpush2.bf16.msra.mxu0 %v2905
    %3045 = vmatprep.subr.bf16.mxu0 %v2904
    %3046 = vmatpush2.bf16.msra.mxu0 %v2903
    %3047 = vmatprep.mubr.bf16.mxu0 %v2616
    %3048 = vmatmul.mubr.bf16.gmra.mxu0 %v2615
    %v3049 = vpop.f32.mrf.mxu0
    %v3050 = vadd.f32 %v2688, %v3049
    %v3051 = vpop.f32.mrf.mxu0
    %v3052 = vadd.f32 %v2692, %v3051
    %v3053 = vpop.f32.mrf.mxu0
    %v3054 = vadd.f32 %v2688, %v3053
    %v3055 = vpop.f32.mrf.mxu0
    %v3056 = vadd.f32 %v2692, %v3055
    %3057 = vdwg.mxu0
    %3058 = vmatprep.subr.bf16.mxu0 %v2934
    %3059 = vmatpush1.bf16.msra.mxu0 %v2933
    %3060 = vmatprep.subr.bf16.mxu0 %v2932
    %3061 = vmatpush1.bf16.msra.mxu0 %v2931
    %3062 = vmatprep.subr.bf16.mxu0 %v2930
    %3063 = vmatpush1.bf16.msra.mxu0 %v2929
    %3064 = vmatprep.subr.bf16.mxu0 %v2928
    %3065 = vmatpush1.bf16.msra.mxu0 %v2927
    %3066 = vmatprep.subr.bf16.mxu0 %v2926
    %3067 = vmatpush1.bf16.msra.mxu0 %v2925
    %3068 = vmatprep.subr.bf16.mxu0 %v2924
    %3069 = vmatpush1.bf16.msra.mxu0 %v2923
    %3070 = vmatprep.subr.bf16.mxu0 %v2922
    %3071 = vmatpush1.bf16.msra.mxu0 %v2921
    %3072 = vmatprep.subr.bf16.mxu0 %v2920
    %3073 = vmatpush1.bf16.msra.mxu0 %v2919
    %3074 = vmatprep.subr.bf16.mxu0 %v2950
    %3075 = vmatpush2.bf16.msra.mxu0 %v2949
    %3076 = vmatprep.subr.bf16.mxu0 %v2948
    %3077 = vmatpush2.bf16.msra.mxu0 %v2947
    %3078 = vmatprep.subr.bf16.mxu0 %v2946
    %3079 = vmatpush2.bf16.msra.mxu0 %v2945
    %3080 = vmatprep.subr.bf16.mxu0 %v2944
    %3081 = vmatpush2.bf16.msra.mxu0 %v2943
    %3082 = vmatprep.subr.bf16.mxu0 %v2942
    %3083 = vmatpush2.bf16.msra.mxu0 %v2941
    %3084 = vmatprep.subr.bf16.mxu0 %v2940
    %3085 = vmatpush2.bf16.msra.mxu0 %v2939
    %3086 = vmatprep.subr.bf16.mxu0 %v2938
    %3087 = vmatpush2.bf16.msra.mxu0 %v2937
    %3088 = vmatprep.subr.bf16.mxu0 %v2936
    %3089 = vmatpush2.bf16.msra.mxu0 %v2935
    %3090 = vmatprep.mubr.bf16.mxu0 %v2618
    %3091 = vmatmul.mubr.bf16.gmra.mxu0 %v2617
    %v3092 = vpop.f32.mrf.mxu0
    %v3093 = vadd.f32 %v3050, %v3092
    %v3094 = vpop.f32.mrf.mxu0
    %v3095 = vadd.f32 %v3052, %v3094
    %v3096 = vpop.f32.mrf.mxu0
    %v3097 = vadd.f32 %v3054, %v3096
    %v3098 = vpop.f32.mrf.mxu0
    %v3099 = vadd.f32 %v3056, %v3098
    %3100 = vdwg.mxu0
    %v3101 = vmax.f32 %v3093, 0.0
    %v3102 = vmax.f32 %v3095, 0.0
    %v3103 = vmax.f32 %v3097, 0.0
    %v3104 = vmax.f32 %v3099, 0.0
    %v3105 = vld [vmem:[%s9] sm:$0x3]
    %v3106 = vunpack.c.l.bf16 %v3105
    %v3108 = vlaneseq
    %v3109 = vshrl.u32 %v3108, 7
    %v3110 = vsub.s32 0, %v3109
    %v3111 = vrot.slane %v3106, %v3110
    %v3112 = vlaneseq
    %v3113 = vshrl.u32 %v3112, 7
    %v3114 = vsub.s32 2, %v3113
    %v3115 = vrot.slane %v3106, %v3114
    %v3118 = vlaneseq
    %v3119 = vshrl.u32 %v3118, 7
    %v3120 = vsub.s32 0, %v3119
    %v3121 = vrot.slane %v3111, %v3120
    %v3122 = vlaneseq
    %v3123 = vshrl.u32 %v3122, 7
    %v3124 = vsub.s32 0, %v3123
    %v3125 = vrot.slane %v3115, %v3124
    %v3126 = vmul.f32 %v3101, %v3121
    %v3127 = vmul.f32 %v3102, %v3125
    %v3128 = vmul.f32 %v3103, %v3121
    %v3129 = vmul.f32 %v3104, %v3125
    %v3130 = vadd.f32 %v3126, %v3127
    %3131 = vadd.xlane.f32.xlu0 %v3130
    %v3132 = vpop.xlane.xlu0 %3131
    %v3133 = vadd.f32 %v3128, %v3129
    %3134 = vadd.xlane.f32.xlu0 %v3133
    %v3135 = vpop.xlane.xlu0 %3134
    %s3136 = sld [smem:[#allocation2]]
    %v3137 = vstv %s3136
    %v3138 = vadd.f32 %v3132, %v3137
    %v3139 = vadd.f32 %v3135, %v3137
    %3140 = vst [vmem:[#allocation12] sm:$0xff] %v3138
    %3141 = vst [vmem:[#allocation12 + $0x8] sm:$0xff] %v3139
    // Predicated region
    $region66: #{tpu_custom_call.1} parent=1 // pred_check
      _
    $region67: #{tpu_custom_call.1} parent=1 // pred_check_branch
      %3143 = sbr.rel (0) target = $region69
    $region68: #{tpu_custom_call.1} parent=1 // pred_region
      %s3145 = ssub.s32 256, 256
      %3146 = vsyncadd [#allocation5], %s3145
      %s3147 = sshll.u32 [#allocation12], 4
      %s3148 = int_to_ptr.vmem [resolvable:$true] %s3147
      %3153 = dma.vmem_to_hbm [thread:$0]  %s3148, 256, %s11, [#allocation5], 128, 128, 8
    $region69: #{tpu_custom_call.1} parent=1 // pred_fallthru
      _
    // Predicated region
    $region70: #{tpu_custom_call.1} parent=1 // pred_check
      _
    $region71: #{tpu_custom_call.1} parent=1 // pred_check_branch
      %3155 = sbr.rel (0) target = $region73
    $region72: #{tpu_custom_call.1} parent=1 // pred_region
      %3156 = dma.done [#allocation5], 256
    $region73: #{tpu_custom_call.1} parent=1 // pred_fallthru
      _
    %3157 = vsyncpa [#allocation4], 1
    %3158 = vsyncpa [#allocation7], 1
    %3159 = vsyncpa [#allocation10], 1
    %3160 = vsyncpa [#allocation5], 1

</llo_original>
